<compile_context>
chip_gen: v5e
topology: v5e:2x2
jax: 0.10.0
libtpu: 0.0.40
codegen_flags: <defaults>
</compile_context>

<pallas_src>
import functools
import math

import jax
import jax.numpy as jnp
from jax import lax
from jax.experimental import pallas as pl
from jax.experimental.pallas import tpu as pltpu


# ------------------------------- the kernel --------------------------------

def mixer_kernel(patches_ref, w_enc_ref, b_enc_ref,
                 wt1t_ref, wt2t_ref, wc1_ref, wc2_ref, vecs_ref,
                 w_cls_ref, b_cls_ref,
                 out_ref, x_scr,
                 *, e_real, p_real, eps=1e-5):
    """Grid = (batch_blocks, num_layers).  One mixer block per grid step."""
    l = pl.program_id(1)
    n, P_pad, E_pad = x_scr.shape
    H_pad = wc1_ref.shape[2]
    inv_e = jnp.float32(1.0 / e_real)

    # 1.0 on real embedding lanes, 0.0 on padding lanes.
    e_mask = (lax.broadcasted_iota(jnp.int32, (1, E_pad), 1)
              < e_real).astype(jnp.float32)

    def matcols(a, w):
        # contract the last (lane) dim of `a` with dim 0 of `w` -> M folded.
        return lax.dot_general(a, w, (((a.ndim - 1,), (0,)), ((), ())),
                               preferred_element_type=jnp.float32)

    def tokmm(wt, x3):
        # wt: (M, K) shared weight; x3: (n, K, E).  Batched matmul (flash-style
        # 'bmk,bke->bme' contraction) -> (n, M, E); keeps E lane-dense and the
        # result already in residual layout (no activation transposes).
        wb = jnp.broadcast_to(wt[None], (n,) + wt.shape)
        return lax.dot_general(wb, x3, (((2,), (1,)), ((0,), (0,))),
                               preferred_element_type=jnp.float32)

    def layernorm(x3, g, b):
        # Padded E lanes of x3 are kept exactly 0, so plain lane-sums over
        # E_pad equal sums over the real E channels (divide by e_real).
        mu = jnp.sum(x3, axis=-1, keepdims=True) * inv_e
        ex2 = jnp.sum(x3 * x3, axis=-1, keepdims=True) * inv_e
        var = ex2 - mu * mu
        # gamma/beta are zero-padded -> padded output lanes stay 0.
        return (x3 - mu) * lax.rsqrt(var + eps) * g + b

    def gelu(v):
        # tanh-based GELU -> EUP slot (overlaps MXU/VPU work).
        return jax.nn.gelu(v, approximate=True)

    # ---- patch encoder + residual init (first layer step only) -------------
    @pl.when(l == 0)
    def _():
        x_scr[...] = matcols(patches_ref[...], w_enc_ref[...]) + b_enc_ref[...]

    # ---- per-layer packed vectors ------------------------------------------
    vec = vecs_ref[0]                                    # (8, V_pad) f32
    ln1_g = vec[0:1, :E_pad]
    ln1_b = vec[1:2, :E_pad]
    bt1 = vec[2:3, :H_pad].reshape(H_pad, 1)             # sublane-oriented bias
    bt2 = vec[3:4, :P_pad].reshape(P_pad, 1)
    ln2_g = vec[4:5, :E_pad]
    ln2_b = vec[5:6, :E_pad]
    bc1 = vec[6:7, :H_pad]
    bc2 = vec[7:8, :E_pad]

    x = x_scr[...]                                       # (n, P_pad, E_pad) f32

    # ---- token mixing --------------------------------------------------------
    xn = layernorm(x, ln1_g, ln1_b)
    u = gelu(tokmm(wt1t_ref[0], xn) + bt1)               # (n, H_pad, E_pad)
    t = tokmm(wt2t_ref[0], u) + bt2                      # (n, P_pad, E_pad)
    # Mask once so the residual's padded E lanes stay exactly 0 (the biases
    # otherwise leak into padding); this is what lets LayerNorm skip masking.
    x = x + t * e_mask

    # ---- channel mixing ------------------------------------------------------
    xn = layernorm(x, ln2_g, ln2_b)
    c = gelu(matcols(xn, wc1_ref[0]) + bc1)              # (n, P_pad, H_pad)
    c = matcols(c, wc2_ref[0]) + bc2                     # (n, P_pad, E_pad)
    x_scr[...] = x + c

    # ---- dropout (identity), mean-pool over real patches, classify ----------
    @pl.when(l == pl.num_programs(1) - 1)
    def _():
        p_mask = (lax.broadcasted_iota(jnp.int32, (P_pad, 1), 0)
                  < p_real).astype(jnp.float32)
        pooled = jnp.sum(x_scr[...] * p_mask, axis=1) * jnp.float32(1.0 / p_real)
        res = jnp.dot(pooled, w_cls_ref[...],
                      preferred_element_type=jnp.float32) + b_cls_ref[...]
        out_ref[...] = res[:, None, :]                   # (n, 1, C_pad)


# ------------------------------ host wrapper --------------------------------

def mlp_mixer_forward(patches, params, *, block_b=None):
    B, P, Dp = patches.shape
    E = params['w_enc'].shape[1]
    H = params['wt1'].shape[2]
    C = params['w_cls'].shape[1]
    L = params['wt1'].shape[0]

    LANE, SUB = 128, 8
    rup = lambda n, m: ((n + m - 1) // m) * m
    E_pad, H_pad = rup(E, LANE), rup(H, LANE)
    C_pad, Dp_pad = rup(C, LANE), rup(Dp, LANE)
    P_pad = rup(P, SUB)
    V_pad = max(E_pad, H_pad, rup(P_pad, LANE))          # packed-vector width

    # ---- generation-aware VMEM budget (128 MiB v5e/v6e, 64 MiB/TC v7x) ------
    try:
        vmem_cap = int(pltpu.get_tpu_info().vmem_capacity_bytes)
    except Exception:
        vmem_cap = 64 << 20            # conservative (v7x per-core) fallback
    vmem_limit = max(vmem_cap - (8 << 20), 16 << 20)     # leave Mosaic headroom

    itm = 4                                              # f32 bytes
    # resident (single-buffered) + streamed (double-buffered) weight bytes
    fixed = (Dp_pad * E_pad + E_pad + E_pad * C_pad + C_pad) * itm
    fixed += 2 * (H_pad * P_pad + P_pad * H_pad
                  + E_pad * H_pad + H_pad * E_pad + 8 * V_pad) * itm
    # per-batch-row bytes: patches block (x2 buffers), residual scratch, the
    # live f32 intermediates, the broadcast token-mix weight and the output.
    per_row = (2 * P_pad * Dp_pad
               + 4 * P_pad * E_pad
               + H_pad * E_pad
               + 2 * P_pad * H_pad
               + 2 * C_pad) * itm

    if block_b is None:
        budget = max(vmem_limit - fixed - (4 << 20), 1 << 20)
        block_b = max(1, min(B, budget // per_row))
        # keep >= 2 batch grid steps when possible so both v7x cores get work.
        if B >= 2 and -(-B // block_b) < 2:
            block_b = -(-B // 2)
    B_pad = rup(B, block_b)
    nb = B_pad // block_b

    f32 = jnp.float32

    def pad(a, shape):
        out = jnp.zeros(shape, f32)
        return out.at[tuple(slice(0, s) for s in a.shape)].set(a.astype(f32))

    # Pack the 8 per-layer vectors into one streamed (L, 8, V_pad) slab.
    vecs = jnp.zeros((L, 8, V_pad), f32)
    vecs = vecs.at[:, 0, :E].set(params['ln1_g'].astype(f32))
    vecs = vecs.at[:, 1, :E].set(params['ln1_b'].astype(f32))
    vecs = vecs.at[:, 2, :H].set(params['bt1'].astype(f32))
    vecs = vecs.at[:, 3, :P].set(params['bt2'].astype(f32))
    vecs = vecs.at[:, 4, :E].set(params['ln2_g'].astype(f32))
    vecs = vecs.at[:, 5, :E].set(params['ln2_b'].astype(f32))
    vecs = vecs.at[:, 6, :H].set(params['bc1'].astype(f32))
    vecs = vecs.at[:, 7, :E].set(params['bc2'].astype(f32))

    args = (
        pad(patches, (B_pad, P_pad, Dp_pad)),                               # 0
        pad(params['w_enc'], (Dp_pad, E_pad)),                              # 1
        pad(params['b_enc'].reshape(1, E), (1, E_pad)),                     # 2
        pad(jnp.transpose(params['wt1'], (0, 2, 1)), (L, H_pad, P_pad)),    # 3
        pad(jnp.transpose(params['wt2'], (0, 2, 1)), (L, P_pad, H_pad)),    # 4
        pad(params['wc1'], (L, E_pad, H_pad)),                              # 5
        pad(params['wc2'], (L, H_pad, E_pad)),                              # 6
        vecs,                                                               # 7
        pad(params['w_cls'], (E_pad, C_pad)),                               # 8
        pad(params['b_cls'].reshape(1, C), (1, C_pad)),                     # 9
    )

    def resident(a):
        zeros = (0,) * a.ndim
        try:   # single-buffer constant blocks (block index never changes)
            return pl.BlockSpec(a.shape, lambda i, l, z=zeros: z,
                                pipeline_mode=pl.Buffered(1))
        except Exception:
            return pl.BlockSpec(a.shape, lambda i, l, z=zeros: z)

    def per_layer(a):   # one layer's slab per step, double-buffered (streamed)
        return pl.BlockSpec((1,) + a.shape[1:], lambda i, l: (l, 0, 0))

    in_specs = [
        pl.BlockSpec((block_b, P_pad, Dp_pad), lambda i, l: (i, 0, 0)),  # patches
        resident(args[1]), resident(args[2]),                            # encoder
        per_layer(args[3]), per_layer(args[4]),                          # token mix
        per_layer(args[5]), per_layer(args[6]),                          # channel mix
        per_layer(args[7]),                                              # packed vecs
        resident(args[8]), resident(args[9]),                            # classifier
    ]
    out_specs = pl.BlockSpec((block_b, 1, C_pad), lambda i, l: (i, 0, 0))

    # Roofline hints for XLA's scheduler (4 matmuls per mixer block).
    flops = 2 * B_pad * (P_pad * Dp_pad * E_pad
                         + 4 * L * P_pad * E_pad * H_pad
                         + E_pad * C_pad)
    transc = B_pad * L * (H_pad * E_pad + P_pad * H_pad)
    streamed = sum(int(a.size) for a in (args[3], args[4], args[5], args[6], args[7]))
    resident_b = sum(int(a.size) for a in (args[1], args[2], args[8], args[9]))
    bytes_acc = itm * (int(args[0].size) + resident_b + nb * streamed + B_pad * C_pad)
    cost = pl.CostEstimate(flops=int(flops), transcendentals=int(transc),
                           bytes_accessed=int(bytes_acc))

    kernel = functools.partial(mixer_kernel, e_real=E, p_real=P)
    out = pl.pallas_call(
        kernel,
        out_shape=jax.ShapeDtypeStruct((B_pad, 1, C_pad), jnp.float32),
        grid=(nb, L),
        in_specs=in_specs,
        out_specs=out_specs,
        scratch_shapes=[pltpu.VMEM((block_b, P_pad, E_pad), jnp.float32)],
        compiler_params=pltpu.CompilerParams(
            dimension_semantics=("parallel", "arbitrary"),
            vmem_limit_bytes=int(vmem_limit)),
        cost_estimate=cost,
    )(*args)
    return out[:B, 0, :C]


# ------------------------------ glue (plain JAX) ----------------------------

def extract_patches(x, p1, p2):
    """Rearrange 'b (p1 h) (p2 w) -> b (p1 p2) (h w)'."""
    B, H, W = x.shape
    h, w = H // p1, W // p2
    x = x.reshape(B, p1, h, p2, w).transpose(0, 1, 3, 2, 4)
    return x.reshape(B, p1 * p2, h * w)


def init_params(key, patch_dim, P, E, H, L, C):
    ks = jax.random.split(key, 12)

    def w(k, fan_in, shape):
        return jax.random.normal(k, shape, jnp.float32) / jnp.float32(math.sqrt(fan_in))

    def b(k, fan_in, shape):
        lim = 1.0 / math.sqrt(fan_in)
        return jax.random.uniform(k, shape, jnp.float32, -lim, lim)

    return dict(
        w_enc=w(ks[0], patch_dim, (patch_dim, E)), b_enc=b(ks[1], patch_dim, (E,)),
        ln1_g=jnp.ones((L, E), jnp.float32), ln1_b=jnp.zeros((L, E), jnp.float32),
        wt1=w(ks[2], P, (L, P, H)), bt1=b(ks[3], P, (L, H)),
        wt2=w(ks[4], H, (L, H, P)), bt2=b(ks[5], H, (L, P)),
        ln2_g=jnp.ones((L, E), jnp.float32), ln2_b=jnp.zeros((L, E), jnp.float32),
        wc1=w(ks[6], E, (L, E, H)), bc1=b(ks[7], E, (L, H)),
        wc2=w(ks[8], H, (L, H, E)), bc2=b(ks[9], H, (L, E)),
        w_cls=w(ks[10], E, (E, C)), b_cls=b(ks[11], E, (C,)),
    )


def mlp_mixer_ref(patches, params, approx_gelu=False):
    """Pure-JAX f32 reference.  approx_gelu=False reproduces the PyTorch
    module (erf GELU); approx_gelu=True matches the kernel's tanh GELU."""

    def gelu(v):
        if approx_gelu:
            return jax.nn.gelu(v, approximate=True)
        return 0.5 * v * (1.0 + lax.erf(v * 0.7071067811865476))

    def ln(v, g, b, eps=1e-5):
        mu = jnp.mean(v, -1, keepdims=True)
        var = jnp.mean((v - mu) ** 2, -1, keepdims=True)
        return (v - mu) * lax.rsqrt(var + eps) * g + b

    x = jnp.einsum('bpd,de->bpe', patches, params['w_enc']) + params['b_enc']
    L = params['wt1'].shape[0]
    for l in range(L):
        xn = ln(x, params['ln1_g'][l], params['ln1_b'][l])
        t = jnp.einsum('bpe,ph->beh', xn, params['wt1'][l]) + params['bt1'][l]
        t = gelu(t)
        t = jnp.einsum('beh,hp->bpe', t, params['wt2'][l]) + params['bt2'][l][None, :, None]
        x = x + t
        xn = ln(x, params['ln2_g'][l], params['ln2_b'][l])
        c = jnp.einsum('bpe,eh->bph', xn, params['wc1'][l]) + params['bc1'][l]
        c = gelu(c)
        c = jnp.einsum('bph,he->bpe', c, params['wc2'][l]) + params['bc2'][l]
        x = x + c
    pooled = jnp.mean(x, axis=1)
    return pooled @ params['w_cls'] + params['b_cls']


# ----------------------------------- main ------------------------------------

if __name__ == "__main__":
    # model config (small, consistent with the module's __init__, channels=None)
    image_dim = (16, 16)
    patch_size = 4
    embedding_dim = 32
    hidden_dim = 32
    num_blocks = 2
    num_classes = 10
    batch = 2

    p1 = image_dim[0] // patch_size
    p2 = image_dim[1] // patch_size
    num_patches = p1 * p2
    patch_dim = patch_size * patch_size            # channels=None branch

    key = jax.random.PRNGKey(0)
    k_x, k_p = jax.random.split(key)
    x = jax.random.normal(k_x, (batch,) + image_dim, jnp.float32)
    params = init_params(k_p, patch_dim, num_patches, embedding_dim, hidden_dim,
                         num_blocks, num_classes)

    patches = extract_patches(x, p1, p2)           # (B, num_patches, patch_size**2)

    out = jax.block_until_ready(mlp_mixer_forward(patches, params))
    assert out.shape == (batch, num_classes)

    # Tight check against a reference matching the kernel math (f32 matmuls,
    # tanh GELU) — validates the Pallas plumbing.
    ref_matched = jax.block_until_ready(mlp_mixer_ref(patches, params, approx_gelu=True))
    assert jnp.allclose(out, ref_matched, rtol=1e-2, atol=1e-2), (out, ref_matched)

    # Looser check against the faithful module semantics (erf GELU); the only
    # deviation is the tanh GELU approximation.
    ref_spec = jax.block_until_ready(mlp_mixer_ref(patches, params))
    assert jnp.allclose(out, ref_spec, rtol=5e-2, atol=5e-2), (out, ref_spec)

    print("KERNEL_OK")
</pallas_src>

<mosaic_0001>
module attributes {stable_mosaic.version = 11 : i64} {
  func.func @mixer_kernel(%arg0: i32, %arg1: i32, %arg2: memref<1x16x128xf32, #tpu.memory_space<vmem>>, %arg3: memref<128x128xf32, #tpu.memory_space<vmem>>, %arg4: memref<1x128xf32, #tpu.memory_space<vmem>>, %arg5: memref<1x128x16xf32, #tpu.memory_space<vmem>>, %arg6: memref<1x16x128xf32, #tpu.memory_space<vmem>>, %arg7: memref<1x128x128xf32, #tpu.memory_space<vmem>>, %arg8: memref<1x128x128xf32, #tpu.memory_space<vmem>>, %arg9: memref<1x8x128xf32, #tpu.memory_space<vmem>>, %arg10: memref<128x128xf32, #tpu.memory_space<vmem>>, %arg11: memref<1x128xf32, #tpu.memory_space<vmem>>, %arg12: memref<1x1x128xf32, #tpu.memory_space<vmem>>, %arg13: memref<1x16x128xf32, #tpu.memory_space<vmem>>) attributes {dimension_semantics = [#tpu.dimension_semantics<parallel>, #tpu.dimension_semantics<arbitrary>], iteration_bounds = array<i64: 2, 2>, scalar_prefetch = 0 : i64, scratch_operands = 1 : i64, tpu.core_type = #tpu.core_type<tc>, window_params = [{transform_indices = @transform_0, window_bounds = array<i64: 1, 16, 128>}, {pipeline_mode = #tpu.pipeline_mode<synchronous>, transform_indices = @transform_1, window_bounds = array<i64: 128, 128>}, {pipeline_mode = #tpu.pipeline_mode<synchronous>, transform_indices = @transform_2, window_bounds = array<i64: 1, 128>}, {transform_indices = @transform_3, window_bounds = array<i64: 1, 128, 16>}, {transform_indices = @transform_4, window_bounds = array<i64: 1, 16, 128>}, {transform_indices = @transform_5, window_bounds = array<i64: 1, 128, 128>}, {transform_indices = @transform_6, window_bounds = array<i64: 1, 128, 128>}, {transform_indices = @transform_7, window_bounds = array<i64: 1, 8, 128>}, {pipeline_mode = #tpu.pipeline_mode<synchronous>, transform_indices = @transform_8, window_bounds = array<i64: 128, 128>}, {pipeline_mode = #tpu.pipeline_mode<synchronous>, transform_indices = @transform_9, window_bounds = array<i64: 1, 128>}, {transform_indices = @transform_10, window_bounds = array<i64: 1, 1, 128>}]} {
    %0 = tpu.iota {dimensions = array<i32: 1>} : vector<1x128xi32>
    %c32_i32 = arith.constant 32 : i32
    %1 = vector.broadcast %c32_i32 : i32 to vector<1x128xi32>
    %2 = arith.cmpi slt, %0, %1 : vector<1x128xi32>
    %3 = arith.extui %2 : vector<1x128xi1> to vector<1x128xi32>
    %4 = arith.sitofp %3 : vector<1x128xi32> to vector<1x128xf32>
    %c0_i32 = arith.constant 0 : i32
    %5 = arith.cmpi eq, %arg1, %c0_i32 : i32
    %6 = arith.extui %5 : i1 to i32
    %c0_i32_0 = arith.constant 0 : i32
    %7 = arith.cmpi ne, %6, %c0_i32_0 : i32
    scf.if %7 {
      %c0_43 = arith.constant 0 : index
      %c0_44 = arith.constant 0 : index
      %c0_45 = arith.constant 0 : index
      %130 = vector.load %arg2[%c0_43, %c0_44, %c0_45] : memref<1x16x128xf32, #tpu.memory_space<vmem>>, vector<1x16x128xf32>
      %c0_46 = arith.constant 0 : index
      %c0_47 = arith.constant 0 : index
      %131 = vector.load %arg3[%c0_46, %c0_47] : memref<128x128xf32, #tpu.memory_space<vmem>>, vector<128x128xf32>
      %cst_48 = arith.constant dense<0.000000e+00> : vector<1x16x128xf32>
      %132 = tpu.matmul %130, %131, %cst_48 {dimension_numbers = #tpu.dot_dimension_numbers<[2], [0], [0, 1], [1], [0, 0, 0, 1, 1, 1], [], []>} : vector<1x16x128xf32>, vector<128x128xf32>, vector<1x16x128xf32> -> vector<1x16x128xf32>
      %c0_49 = arith.constant 0 : index
      %c0_50 = arith.constant 0 : index
      %133 = vector.load %arg4[%c0_49, %c0_50] : memref<1x128xf32, #tpu.memory_space<vmem>>, vector<1x128xf32>
      %134 = vector.shape_cast %133 : vector<1x128xf32> to vector<1x1x128xf32>
      %135 = vector.broadcast %134 : vector<1x1x128xf32> to vector<1x16x128xf32>
      %136 = arith.addf %132, %135 : vector<1x16x128xf32>
      %c0_51 = arith.constant 0 : index
      %c0_52 = arith.constant 0 : index
      %c0_53 = arith.constant 0 : index
      %137 = vector.load %arg13[%c0_51, %c0_52, %c0_53] : memref<1x16x128xf32, #tpu.memory_space<vmem>>, vector<1x16x128xf32>
      tpu.vector_store %arg13[%c0_51, %c0_52, %c0_53], %136 {strides = array<i32>} : memref<1x16x128xf32, #tpu.memory_space<vmem>>, vector<1x16x128xf32>,
    } else {
    }
    %c0 = arith.constant 0 : index
    %c0_1 = arith.constant 0 : index
    %c0_2 = arith.constant 0 : index
    %8 = vector.load %arg9[%c0, %c0_1, %c0_2] : memref<1x8x128xf32, #tpu.memory_space<vmem>>, vector<1x8x128xf32>
    %9 = vector.shape_cast %8 : vector<1x8x128xf32> to vector<8x128xf32>
    %10 = vector.extract_strided_slice %9 {offsets = [0, 0], sizes = [1, 128], strides = [1, 1]} : vector<8x128xf32> to vector<1x128xf32>
    %11 = vector.extract_strided_slice %9 {offsets = [1, 0], sizes = [1, 128], strides = [1, 1]} : vector<8x128xf32> to vector<1x128xf32>
    %12 = vector.extract_strided_slice %9 {offsets = [2, 0], sizes = [1, 128], strides = [1, 1]} : vector<8x128xf32> to vector<1x128xf32>
    %13 = vector.shape_cast %12 : vector<1x128xf32> to vector<128x1xf32>
    %14 = vector.extract_strided_slice %9 {offsets = [3, 0], sizes = [1, 16], strides = [1, 1]} : vector<8x128xf32> to vector<1x16xf32>
    %15 = vector.shape_cast %14 : vector<1x16xf32> to vector<16x1xf32>
    %16 = vector.extract_strided_slice %9 {offsets = [4, 0], sizes = [1, 128], strides = [1, 1]} : vector<8x128xf32> to vector<1x128xf32>
    %17 = vector.extract_strided_slice %9 {offsets = [5, 0], sizes = [1, 128], strides = [1, 1]} : vector<8x128xf32> to vector<1x128xf32>
    %18 = vector.extract_strided_slice %9 {offsets = [6, 0], sizes = [1, 128], strides = [1, 1]} : vector<8x128xf32> to vector<1x128xf32>
    %19 = vector.extract_strided_slice %9 {offsets = [7, 0], sizes = [1, 128], strides = [1, 1]} : vector<8x128xf32> to vector<1x128xf32>
    %c0_3 = arith.constant 0 : index
    %c0_4 = arith.constant 0 : index
    %c0_5 = arith.constant 0 : index
    %20 = vector.load %arg13[%c0_3, %c0_4, %c0_5] : memref<1x16x128xf32, #tpu.memory_space<vmem>>, vector<1x16x128xf32>
    %cst = arith.constant dense<0.000000e+00> : vector<1x16xf32>
    %21 = vector.multi_reduction <add>, %20, %cst [2] : vector<1x16x128xf32> to vector<1x16xf32>
    %22 = vector.shape_cast %21 : vector<1x16xf32> to vector<1x16x1xf32>
    %cst_6 = arith.constant 3.125000e-02 : f32
    %23 = vector.broadcast %cst_6 : f32 to vector<1x16x1xf32>
    %24 = arith.mulf %22, %23 : vector<1x16x1xf32>
    %25 = arith.mulf %20, %20 : vector<1x16x128xf32>
    %cst_7 = arith.constant dense<0.000000e+00> : vector<1x16xf32>
    %26 = vector.multi_reduction <add>, %25, %cst_7 [2] : vector<1x16x128xf32> to vector<1x16xf32>
    %27 = vector.shape_cast %26 : vector<1x16xf32> to vector<1x16x1xf32>
    %cst_8 = arith.constant 3.125000e-02 : f32
    %28 = vector.broadcast %cst_8 : f32 to vector<1x16x1xf32>
    %29 = arith.mulf %27, %28 : vector<1x16x1xf32>
    %30 = arith.mulf %24, %24 : vector<1x16x1xf32>
    %31 = arith.subf %29, %30 : vector<1x16x1xf32>
    %32 = vector.broadcast %24 : vector<1x16x1xf32> to vector<1x16x128xf32>
    %33 = arith.subf %20, %32 : vector<1x16x128xf32>
    %cst_9 = arith.constant 9.99999974E-6 : f32
    %34 = vector.broadcast %cst_9 : f32 to vector<1x16x1xf32>
    %35 = arith.addf %31, %34 : vector<1x16x1xf32>
    %36 = math.rsqrt %35 : vector<1x16x1xf32>
    %37 = vector.broadcast %36 : vector<1x16x1xf32> to vector<1x16x128xf32>
    %38 = arith.mulf %33, %37 : vector<1x16x128xf32>
    %39 = vector.shape_cast %10 : vector<1x128xf32> to vector<1x1x128xf32>
    %40 = vector.broadcast %39 : vector<1x1x128xf32> to vector<1x16x128xf32>
    %41 = arith.mulf %38, %40 : vector<1x16x128xf32>
    %42 = vector.shape_cast %11 : vector<1x128xf32> to vector<1x1x128xf32>
    %43 = vector.broadcast %42 : vector<1x1x128xf32> to vector<1x16x128xf32>
    %44 = arith.addf %41, %43 : vector<1x16x128xf32>
    %c0_10 = arith.constant 0 : index
    %c0_11 = arith.constant 0 : index
    %c0_12 = arith.constant 0 : index
    %45 = vector.load %arg5[%c0_10, %c0_11, %c0_12] : memref<1x128x16xf32, #tpu.memory_space<vmem>>, vector<1x128x16xf32>
    %46 = vector.shape_cast %45 : vector<1x128x16xf32> to vector<128x16xf32>
    %47 = vector.shape_cast %46 : vector<128x16xf32> to vector<1x128x16xf32>
    %cst_13 = arith.constant dense<0.000000e+00> : vector<1x128x128xf32>
    %48 = tpu.matmul %47, %44, %cst_13 {dimension_numbers = #tpu.dot_dimension_numbers<[2], [1], [1], [2], [0, 0, 0, 1, 1, 2], [0], [0]>} : vector<1x128x16xf32>, vector<1x16x128xf32>, vector<1x128x128xf32> -> vector<1x128x128xf32>
    %49 = vector.shape_cast %13 : vector<128x1xf32> to vector<1x128x1xf32>
    %50 = vector.broadcast %49 : vector<1x128x1xf32> to vector<1x128x128xf32>
    %51 = arith.addf %48, %50 : vector<1x128x128xf32>
    %52 = arith.mulf %51, %51 : vector<1x128x128xf32>
    %53 = arith.mulf %51, %52 : vector<1x128x128xf32>
    %cst_14 = arith.constant 4.471500e-02 : f32
    %54 = vector.broadcast %cst_14 : f32 to vector<1x128x128xf32>
    %55 = arith.mulf %54, %53 : vector<1x128x128xf32>
    %56 = arith.addf %51, %55 : vector<1x128x128xf32>
    %cst_15 = arith.constant 0.797884583 : f32
    %57 = vector.broadcast %cst_15 : f32 to vector<1x128x128xf32>
    %58 = arith.mulf %57, %56 : vector<1x128x128xf32>
    %59 = math.tanh %58 : vector<1x128x128xf32>
    %cst_16 = arith.constant 1.000000e+00 : f32
    %60 = vector.broadcast %cst_16 : f32 to vector<1x128x128xf32>
    %61 = arith.addf %60, %59 : vector<1x128x128xf32>
    %cst_17 = arith.constant 5.000000e-01 : f32
    %62 = vector.broadcast %cst_17 : f32 to vector<1x128x128xf32>
    %63 = arith.mulf %62, %61 : vector<1x128x128xf32>
    %64 = arith.mulf %51, %63 : vector<1x128x128xf32>
    %c0_18 = arith.constant 0 : index
    %c0_19 = arith.constant 0 : index
    %c0_20 = arith.constant 0 : index
    %65 = vector.load %arg6[%c0_18, %c0_19, %c0_20] : memref<1x16x128xf32, #tpu.memory_space<vmem>>, vector<1x16x128xf32>
    %66 = vector.shape_cast %65 : vector<1x16x128xf32> to vector<16x128xf32>
    %67 = vector.shape_cast %66 : vector<16x128xf32> to vector<1x16x128xf32>
    %cst_21 = arith.constant dense<0.000000e+00> : vector<1x16x128xf32>
    %68 = tpu.matmul %67, %64, %cst_21 {dimension_numbers = #tpu.dot_dimension_numbers<[2], [1], [1], [2], [0, 0, 0, 1, 1, 2], [0], [0]>} : vector<1x16x128xf32>, vector<1x128x128xf32>, vector<1x16x128xf32> -> vector<1x16x128xf32>
    %69 = vector.shape_cast %15 : vector<16x1xf32> to vector<1x16x1xf32>
    %70 = vector.broadcast %69 : vector<1x16x1xf32> to vector<1x16x128xf32>
    %71 = arith.addf %68, %70 : vector<1x16x128xf32>
    %72 = vector.shape_cast %4 : vector<1x128xf32> to vector<1x1x128xf32>
    %73 = vector.broadcast %72 : vector<1x1x128xf32> to vector<1x16x128xf32>
    %74 = arith.mulf %71, %73 : vector<1x16x128xf32>
    %75 = arith.addf %20, %74 : vector<1x16x128xf32>
    %cst_22 = arith.constant dense<0.000000e+00> : vector<1x16xf32>
    %76 = vector.multi_reduction <add>, %75, %cst_22 [2] : vector<1x16x128xf32> to vector<1x16xf32>
    %77 = vector.shape_cast %76 : vector<1x16xf32> to vector<1x16x1xf32>
    %cst_23 = arith.constant 3.125000e-02 : f32
    %78 = vector.broadcast %cst_23 : f32 to vector<1x16x1xf32>
    %79 = arith.mulf %77, %78 : vector<1x16x1xf32>
    %80 = arith.mulf %75, %75 : vector<1x16x128xf32>
    %cst_24 = arith.constant dense<0.000000e+00> : vector<1x16xf32>
    %81 = vector.multi_reduction <add>, %80, %cst_24 [2] : vector<1x16x128xf32> to vector<1x16xf32>
    %82 = vector.shape_cast %81 : vector<1x16xf32> to vector<1x16x1xf32>
    %cst_25 = arith.constant 3.125000e-02 : f32
    %83 = vector.broadcast %cst_25 : f32 to vector<1x16x1xf32>
    %84 = arith.mulf %82, %83 : vector<1x16x1xf32>
    %85 = arith.mulf %79, %79 : vector<1x16x1xf32>
    %86 = arith.subf %84, %85 : vector<1x16x1xf32>
    %87 = vector.broadcast %79 : vector<1x16x1xf32> to vector<1x16x128xf32>
    %88 = arith.subf %75, %87 : vector<1x16x128xf32>
    %cst_26 = arith.constant 9.99999974E-6 : f32
    %89 = vector.broadcast %cst_26 : f32 to vector<1x16x1xf32>
    %90 = arith.addf %86, %89 : vector<1x16x1xf32>
    %91 = math.rsqrt %90 : vector<1x16x1xf32>
    %92 = vector.broadcast %91 : vector<1x16x1xf32> to vector<1x16x128xf32>
    %93 = arith.mulf %88, %92 : vector<1x16x128xf32>
    %94 = vector.shape_cast %16 : vector<1x128xf32> to vector<1x1x128xf32>
    %95 = vector.broadcast %94 : vector<1x1x128xf32> to vector<1x16x128xf32>
    %96 = arith.mulf %93, %95 : vector<1x16x128xf32>
    %97 = vector.shape_cast %17 : vector<1x128xf32> to vector<1x1x128xf32>
    %98 = vector.broadcast %97 : vector<1x1x128xf32> to vector<1x16x128xf32>
    %99 = arith.addf %96, %98 : vector<1x16x128xf32>
    %c0_27 = arith.constant 0 : index
    %c0_28 = arith.constant 0 : index
    %c0_29 = arith.constant 0 : index
    %100 = vector.load %arg7[%c0_27, %c0_28, %c0_29] : memref<1x128x128xf32, #tpu.memory_space<vmem>>, vector<1x128x128xf32>
    %101 = vector.shape_cast %100 : vector<1x128x128xf32> to vector<128x128xf32>
    %cst_30 = arith.constant dense<0.000000e+00> : vector<1x16x128xf32>
    %102 = tpu.matmul %99, %101, %cst_30 {dimension_numbers = #tpu.dot_dimension_numbers<[2], [0], [0, 1], [1], [0, 0, 0, 1, 1, 1], [], []>} : vector<1x16x128xf32>, vector<128x128xf32>, vector<1x16x128xf32> -> vector<1x16x128xf32>
    %103 = vector.shape_cast %18 : vector<1x128xf32> to vector<1x1x128xf32>
    %104 = vector.broadcast %103 : vector<1x1x128xf32> to vector<1x16x128xf32>
    %105 = arith.addf %102, %104 : vector<1x16x128xf32>
    %106 = arith.mulf %105, %105 : vector<1x16x128xf32>
    %107 = arith.mulf %105, %106 : vector<1x16x128xf32>
    %cst_31 = arith.constant 4.471500e-02 : f32
    %108 = vector.broadcast %cst_31 : f32 to vector<1x16x128xf32>
    %109 = arith.mulf %108, %107 : vector<1x16x128xf32>
    %110 = arith.addf %105, %109 : vector<1x16x128xf32>
    %cst_32 = arith.constant 0.797884583 : f32
    %111 = vector.broadcast %cst_32 : f32 to vector<1x16x128xf32>
    %112 = arith.mulf %111, %110 : vector<1x16x128xf32>
    %113 = math.tanh %112 : vector<1x16x128xf32>
    %cst_33 = arith.constant 1.000000e+00 : f32
    %114 = vector.broadcast %cst_33 : f32 to vector<1x16x128xf32>
    %115 = arith.addf %114, %113 : vector<1x16x128xf32>
    %cst_34 = arith.constant 5.000000e-01 : f32
    %116 = vector.broadcast %cst_34 : f32 to vector<1x16x128xf32>
    %117 = arith.mulf %116, %115 : vector<1x16x128xf32>
    %118 = arith.mulf %105, %117 : vector<1x16x128xf32>
    %c0_35 = arith.constant 0 : index
    %c0_36 = arith.constant 0 : index
    %c0_37 = arith.constant 0 : index
    %119 = vector.load %arg8[%c0_35, %c0_36, %c0_37] : memref<1x128x128xf32, #tpu.memory_space<vmem>>, vector<1x128x128xf32>
    %120 = vector.shape_cast %119 : vector<1x128x128xf32> to vector<128x128xf32>
    %cst_38 = arith.constant dense<0.000000e+00> : vector<1x16x128xf32>
    %121 = tpu.matmul %118, %120, %cst_38 {dimension_numbers = #tpu.dot_dimension_numbers<[2], [0], [0, 1], [1], [0, 0, 0, 1, 1, 1], [], []>} : vector<1x16x128xf32>, vector<128x128xf32>, vector<1x16x128xf32> -> vector<1x16x128xf32>
    %122 = vector.shape_cast %19 : vector<1x128xf32> to vector<1x1x128xf32>
    %123 = vector.broadcast %122 : vector<1x1x128xf32> to vector<1x16x128xf32>
    %124 = arith.addf %121, %123 : vector<1x16x128xf32>
    %125 = arith.addf %75, %124 : vector<1x16x128xf32>
    %c0_39 = arith.constant 0 : index
    %c0_40 = arith.constant 0 : index
    %c0_41 = arith.constant 0 : index
    %126 = vector.load %arg13[%c0_39, %c0_40, %c0_41] : memref<1x16x128xf32, #tpu.memory_space<vmem>>, vector<1x16x128xf32>
    tpu.vector_store %arg13[%c0_39, %c0_40, %c0_41], %125 {strides = array<i32>} : memref<1x16x128xf32, #tpu.memory_space<vmem>>, vector<1x16x128xf32>,
    %c1_i32 = arith.constant 1 : i32
    %127 = arith.cmpi eq, %arg1, %c1_i32 : i32
    %128 = arith.extui %127 : i1 to i32
    %c0_i32_42 = arith.constant 0 : i32
    %129 = arith.cmpi ne, %128, %c0_i32_42 : i32
    scf.if %129 {
      %130 = tpu.iota {dimensions = array<i32: 0>} : vector<16x1xi32>
      %c16_i32 = arith.constant 16 : i32
      %131 = vector.broadcast %c16_i32 : i32 to vector<16x1xi32>
      %132 = arith.cmpi slt, %130, %131 : vector<16x1xi32>
      %133 = arith.extui %132 : vector<16x1xi1> to vector<16x1xi32>
      %134 = arith.sitofp %133 : vector<16x1xi32> to vector<16x1xf32>
      %c0_43 = arith.constant 0 : index
      %c0_44 = arith.constant 0 : index
      %c0_45 = arith.constant 0 : index
      %135 = vector.load %arg13[%c0_43, %c0_44, %c0_45] : memref<1x16x128xf32, #tpu.memory_space<vmem>>, vector<1x16x128xf32>
      %136 = vector.shape_cast %134 : vector<16x1xf32> to vector<1x16x1xf32>
      %137 = vector.broadcast %136 : vector<1x16x1xf32> to vector<1x16x128xf32>
      %138 = arith.mulf %135, %137 : vector<1x16x128xf32>
      %cst_46 = arith.constant dense<0.000000e+00> : vector<1x128xf32>
      %139 = vector.multi_reduction <add>, %138, %cst_46 [1] : vector<1x16x128xf32> to vector<1x128xf32>
      %cst_47 = arith.constant 6.250000e-02 : f32
      %140 = vector.broadcast %cst_47 : f32 to vector<1x128xf32>
      %141 = arith.mulf %139, %140 : vector<1x128xf32>
      %c0_48 = arith.constant 0 : index
      %c0_49 = arith.constant 0 : index
      %142 = vector.load %arg10[%c0_48, %c0_49] : memref<128x128xf32, #tpu.memory_space<vmem>>, vector<128x128xf32>
      %cst_50 = arith.constant dense<0.000000e+00> : vector<1x128xf32>
      %143 = tpu.matmul %141, %142, %cst_50 {dimension_numbers = #tpu.dot_dimension_numbers<[1], [0], [0], [1], [0, 0, 1, 1], [], []>} : vector<1x128xf32>, vector<128x128xf32>, vector<1x128xf32> -> vector<1x128xf32>
      %c0_51 = arith.constant 0 : index
      %c0_52 = arith.constant 0 : index
      %144 = vector.load %arg11[%c0_51, %c0_52] : memref<1x128xf32, #tpu.memory_space<vmem>>, vector<1x128xf32>
      %145 = arith.addf %143, %144 : vector<1x128xf32>
      %146 = vector.shape_cast %145 : vector<1x128xf32> to vector<1x1x128xf32>
      %c0_53 = arith.constant 0 : index
      %c0_54 = arith.constant 0 : index
      %c0_55 = arith.constant 0 : index
      %147 = vector.load %arg12[%c0_53, %c0_54, %c0_55] : memref<1x1x128xf32, #tpu.memory_space<vmem>>, vector<1x1x128xf32>
      tpu.vector_store %arg12[%c0_53, %c0_54, %c0_55], %146 {strides = array<i32>} : memref<1x1x128xf32, #tpu.memory_space<vmem>>, vector<1x1x128xf32>,
    } else {
    }
    return
  }
  func.func @transform_0(%arg0: i32, %arg1: i32) -> (i32, i32, i32) {
    %c0_i32 = arith.constant 0 : i32
    %c0_i32_0 = arith.constant 0 : i32
    %c0_i32_1 = arith.constant 0 : i32
    return %arg0, %c0_i32, %c0_i32_0 : i32, i32, i32
  }
  func.func @transform_1(%arg0: i32, %arg1: i32) -> (i32, i32) {
    %c0_i32 = arith.constant 0 : i32
    %c0_i32_0 = arith.constant 0 : i32
    %c0_i32_1 = arith.constant 0 : i32
    return %c0_i32, %c0_i32_0 : i32, i32
  }
  func.func @transform_2(%arg0: i32, %arg1: i32) -> (i32, i32) {
    %c0_i32 = arith.constant 0 : i32
    %c0_i32_0 = arith.constant 0 : i32
    %c0_i32_1 = arith.constant 0 : i32
    return %c0_i32, %c0_i32_0 : i32, i32
  }
  func.func @transform_3(%arg0: i32, %arg1: i32) -> (i32, i32, i32) {
    %c0_i32 = arith.constant 0 : i32
    %c0_i32_0 = arith.constant 0 : i32
    %c0_i32_1 = arith.constant 0 : i32
    return %arg1, %c0_i32, %c0_i32_0 : i32, i32, i32
  }
  func.func @transform_4(%arg0: i32, %arg1: i32) -> (i32, i32, i32) {
    %c0_i32 = arith.constant 0 : i32
    %c0_i32_0 = arith.constant 0 : i32
    %c0_i32_1 = arith.constant 0 : i32
    return %arg1, %c0_i32, %c0_i32_0 : i32, i32, i32
  }
  func.func @transform_5(%arg0: i32, %arg1: i32) -> (i32, i32, i32) {
    %c0_i32 = arith.constant 0 : i32
    %c0_i32_0 = arith.constant 0 : i32
    %c0_i32_1 = arith.constant 0 : i32
    return %arg1, %c0_i32, %c0_i32_0 : i32, i32, i32
  }
  func.func @transform_6(%arg0: i32, %arg1: i32) -> (i32, i32, i32) {
    %c0_i32 = arith.constant 0 : i32
    %c0_i32_0 = arith.constant 0 : i32
    %c0_i32_1 = arith.constant 0 : i32
    return %arg1, %c0_i32, %c0_i32_0 : i32, i32, i32
  }
  func.func @transform_7(%arg0: i32, %arg1: i32) -> (i32, i32, i32) {
    %c0_i32 = arith.constant 0 : i32
    %c0_i32_0 = arith.constant 0 : i32
    %c0_i32_1 = arith.constant 0 : i32
    return %arg1, %c0_i32, %c0_i32_0 : i32, i32, i32
  }
  func.func @transform_8(%arg0: i32, %arg1: i32) -> (i32, i32) {
    %c0_i32 = arith.constant 0 : i32
    %c0_i32_0 = arith.constant 0 : i32
    %c0_i32_1 = arith.constant 0 : i32
    return %c0_i32, %c0_i32_0 : i32, i32
  }
  func.func @transform_9(%arg0: i32, %arg1: i32) -> (i32, i32) {
    %c0_i32 = arith.constant 0 : i32
    %c0_i32_0 = arith.constant 0 : i32
    %c0_i32_1 = arith.constant 0 : i32
    return %c0_i32, %c0_i32_0 : i32, i32
  }
  func.func @transform_10(%arg0: i32, %arg1: i32) -> (i32, i32, i32) {
    %c0_i32 = arith.constant 0 : i32
    %c0_i32_0 = arith.constant 0 : i32
    %c0_i32_1 = arith.constant 0 : i32
    return %arg0, %c0_i32, %c0_i32_0 : i32, i32, i32
  }
}

</mosaic_0001>

<llo_original>
// kernel: tpu_custom_call.1
$region0: #{tpu_custom_call.1}
  #allocation0 [shape = 'u32[]', space=smem, size = 0x4, offset = 0x4, fixed_abs, tag = 'smem constant byte address 0x4 - core index']
  #allocation1 [shape = 'u32[72,128]{1,0:T(1,128)}', space=vmem, size = 0x9000, scoped, tag = 'internal scratch']
  #allocation2 [shape = 'f32[1,16,128]{2,1,0:T(8,128)}', space=vmem, size = 0x2000, scoped, tag = 'scratch operand']
  %s0 = inlined_call_operand.vmem [shape: f32[2,16,128], index: 0, kind: input, shape index: {}]
  %s1 = inlined_call_operand.hbm [shape: f32[128,128], index: 1, kind: input, shape index: {}]
  %s2 = inlined_call_operand.vmem [shape: f32[1,128], index: 2, kind: input, shape index: {}]
  %s3 = inlined_call_operand.vmem [shape: f32[2,128,16], index: 3, kind: input, shape index: {}]
  %s4 = inlined_call_operand.hbm [shape: f32[2,16,128], index: 4, kind: input, shape index: {}]
  %s5 = inlined_call_operand.vmem [shape: f32[2,128,128], index: 5, kind: input, shape index: {}]
  %s6 = inlined_call_operand.hbm [shape: f32[2,128,128], index: 6, kind: input, shape index: {}]
  %s7 = inlined_call_operand.hbm [shape: f32[2,8,128], index: 7, kind: input, shape index: {}]
  %s8 = inlined_call_operand.hbm [shape: f32[128,128], index: 8, kind: input, shape index: {}]
  %s9 = inlined_call_operand.vmem [shape: f32[1,128], index: 9, kind: input, shape index: {}]
  %s10 = inlined_call_operand.hbm [shape: f32[2,1,128], index: 10, kind: output, shape index: {}]
  %s11 = sld [smem:[#allocation0]]
  $region101: #{tpu_custom_call.1} parent=0
    _
  %s13 = ssub.s32 1, %s11
  %s14 = scalar_select 0, %s13, %s11
  $region1: #{tpu_custom_call.1} parent=0
    #allocation3 [shape = 'u8[65536]{0}', space=vmem, size = 0x10000, scoped, tag = 'input window, operand 1, single buffered']
    #allocation4 [shape = 's32[2]{0}', space=sflag, size = 0x8, scoped, tag = 'scoped memory for tpu_custom_call.1']
    #allocation5 [shape = 's32[2]{0}', space=sflag, size = 0x8, scoped, tag = 'scoped memory for tpu_custom_call.1']
    #allocation6 [shape = 'u8[16384]{0}', space=vmem, size = 0x4000, scoped, tag = 'input window, operand 4']
    #allocation7 [shape = 's32[2]{0}', space=sflag, size = 0x8, scoped, tag = 'scoped memory for tpu_custom_call.1']
    #allocation8 [shape = 'u8[131072]{0}', space=vmem, size = 0x20000, scoped, tag = 'input window, operand 6']
    #allocation9 [shape = 'u8[8192]{0}', space=vmem, size = 0x2000, scoped, tag = 'input window, operand 7']
    #allocation10 [shape = 's32[2]{0}', space=sflag, size = 0x8, scoped, tag = 'scoped memory for tpu_custom_call.1']
    #allocation11 [shape = 'u8[65536]{0}', space=vmem, size = 0x10000, scoped, tag = 'input window, operand 8, single buffered']
    #allocation12 [shape = 'u8[1024]{0}', space=vmem, size = 0x400, scoped, tag = 'output window, operand 0']
    %15 = vsyncpa [#allocation4], 0
    %16 = vsyncpa [#allocation7], 0
    %s17 = scalar_lea.sflag [#allocation7], 1
    %18 = vsyncpa %s17, 0
    %19 = vsyncpa [#allocation10], 0
    %s20 = scalar_lea.sflag [#allocation10], 1
    %21 = vsyncpa %s20, 0
    %22 = vsyncpa [#allocation5], 0
    %s23 = scalar_lea.sflag [#allocation5], 1
    %24 = vsyncpa %s23, 0
    loop: start=0, step=1, limit=6
    $region2: #{tpu_custom_call.1} parent=1 // loop_pre_header
      _
    $region3: #{tpu_custom_call.1} parent=1 // loop_header
      %s26 = sphi 0, %s30
      %p27 = scmp.ge.s32.totalorder %s26, 6
      %s33 = sphi 0, %s45
      %s34 = sphi 0, %s41
      %s35 = sphi 0, %s33
      %s36 = sphi 0, %s34
      %s37 = sphi 0, %s35
      %s38 = sphi 0, %s36
      %s48 = sphi 0, %s50
      %s51 = sphi 0, %s48
      %s52 = sphi 0, %s51
      %s68 = sphi 0, %s52
      %s72 = sphi 0, %s72
      %s74 = sphi 0, %s72
      %s75 = sphi 0, %s74
      %s89 = sphi 0, %s75
      %s93 = sphi 0, %s93
      %s95 = sphi 0, %s93
      %s96 = sphi 0, %s95
      %s110 = sphi 0, %s96
      %s116 = sphi 0, %s118
      %s119 = sphi 0, %s116
      %s120 = sphi 0, %s119
      %s136 = sphi 0, %s120
      %s142 = sphi 0, %s144
      %s145 = sphi 0, %s142
      %s146 = sphi 0, %s145
      %s162 = sphi 0, %s146
      %s168 = sphi 0, %s170
      %s171 = sphi 0, %s168
      %s172 = sphi 0, %s171
      %s188 = sphi 0, %s172
      %s194 = sphi 0, %s196
      %s197 = sphi 0, %s194
      %s198 = sphi 0, %s197
      %s214 = sphi 0, %s198
      %s220 = sphi 0, %s222
      %s223 = sphi 0, %s220
      %s224 = sphi 0, %s223
      %s240 = sphi 0, %s224
      %s244 = sphi 0, %s244
      %s246 = sphi 0, %s244
      %s247 = sphi 0, %s246
      %s261 = sphi 0, %s247
      %s265 = sphi 0, %s265
      %s267 = sphi 0, %s265
      %s268 = sphi 0, %s267
      %s282 = sphi 0, %s268
      %s288 = sphi 0, %s290
      %s291 = sphi 0, %s288
      %s292 = sphi 0, %s291
      %s308 = sphi 0, %s292
    $region4: #{tpu_custom_call.1} parent=1 // loop_header_branch
      %29 = sbr.rel (%p27) target = $region8
    $region5: #{tpu_custom_call.1} parent=1 // loop_body
      %s31 = ssub.s32 %s26, 1
      %s32 = ssub.s32 %s26, 2
      %s39 = sadd.s32 1, %s34
      %p40 = scmp.ge.s32.totalorder %s39, 2
      %s41 = scalar_select %p40, 0, %s39
      %s42 = sadd.s32 1, %s33
      %s43 = scalar_select %p40, %s42, %s33
      %p44 = scmp.ge.s32.totalorder %s43, 2
      %s45 = scalar_select %p44, 0, %s43
      %s46 = ssub.s32 %s33, %s45
      %p47 = scmp.eq.s32.totalorder %s46, 0
      %s49 = sadd.s32 %s48, 1
      %s50 = scalar_select %p47, %s48, %s49
      %p53 = pneg %p47
      %p54 = scmp.eq.s32.totalorder %s26, 3
      %p55 = por %p53, %p54
      %p56 = scmp.ne.s32.totalorder %s48, %s51
      %p57 = scmp.eq.s32.totalorder %s26, 0
      %p58 = por %p56, %p57
      %p59 = scmp.ne.s32.totalorder %s48, %s51
      %p60 = scmp.eq.s32.totalorder %s31, 3
      %p61 = por %p59, %p60
      %p62 = scmp.ne.s32.totalorder %s51, %s52
      %p63 = scmp.eq.s32.totalorder %s31, 0
      %p64 = por %p62, %p63
      %p65 = scmp.ne.s32.totalorder %s51, %s52
      %p66 = scmp.eq.s32.totalorder %s32, 3
      %p67 = por %p65, %p66
      %p69 = scmp.ne.s32.totalorder %s52, %s68
      %p70 = scmp.eq.s32.totalorder %s32, 0
      %p71 = por %p69, %p70
      %s73 = sadd.s32 %s72, 1
      %p76 = scmp.eq.s32.totalorder %s26, 3
      %p77 = scmp.ne.s32.totalorder %s72, %s74
      %p78 = scmp.eq.s32.totalorder %s26, 0
      %p79 = por %p77, %p78
      %p80 = scmp.ne.s32.totalorder %s72, %s74
      %p81 = scmp.eq.s32.totalorder %s31, 3
      %p82 = por %p80, %p81
      %p83 = scmp.ne.s32.totalorder %s74, %s75
      %p84 = scmp.eq.s32.totalorder %s31, 0
      %p85 = por %p83, %p84
      %p86 = scmp.ne.s32.totalorder %s74, %s75
      %p87 = scmp.eq.s32.totalorder %s32, 3
      %p88 = por %p86, %p87
      %p90 = scmp.ne.s32.totalorder %s75, %s89
      %p91 = scmp.eq.s32.totalorder %s32, 0
      %p92 = por %p90, %p91
      %s94 = sadd.s32 %s93, 1
      %p97 = scmp.eq.s32.totalorder %s26, 3
      %p98 = scmp.ne.s32.totalorder %s93, %s95
      %p99 = scmp.eq.s32.totalorder %s26, 0
      %p100 = por %p98, %p99
      %p101 = scmp.ne.s32.totalorder %s93, %s95
      %p102 = scmp.eq.s32.totalorder %s31, 3
      %p103 = por %p101, %p102
      %p104 = scmp.ne.s32.totalorder %s95, %s96
      %p105 = scmp.eq.s32.totalorder %s31, 0
      %p106 = por %p104, %p105
      %p107 = scmp.ne.s32.totalorder %s95, %s96
      %p108 = scmp.eq.s32.totalorder %s32, 3
      %p109 = por %p107, %p108
      %p111 = scmp.ne.s32.totalorder %s96, %s110
      %p112 = scmp.eq.s32.totalorder %s32, 0
      %p113 = por %p111, %p112
      %s114 = ssub.s32 %s34, %s41
      %p115 = scmp.eq.s32.totalorder %s114, 0
      %s117 = sadd.s32 %s116, 1
      %s118 = scalar_select %p115, %s116, %s117
      %p121 = pneg %p115
      %p122 = scmp.eq.s32.totalorder %s26, 3
      %p123 = por %p121, %p122
      %p124 = scmp.ne.s32.totalorder %s116, %s119
      %p125 = scmp.eq.s32.totalorder %s26, 0
      %p126 = por %p124, %p125
      %p127 = scmp.ne.s32.totalorder %s116, %s119
      %p128 = scmp.eq.s32.totalorder %s31, 3
      %p129 = por %p127, %p128
      %p130 = scmp.ne.s32.totalorder %s119, %s120
      %p131 = scmp.eq.s32.totalorder %s31, 0
      %p132 = por %p130, %p131
      %p133 = scmp.ne.s32.totalorder %s119, %s120
      %p134 = scmp.eq.s32.totalorder %s32, 3
      %p135 = por %p133, %p134
      %p137 = scmp.ne.s32.totalorder %s120, %s136
      %p138 = scmp.eq.s32.totalorder %s32, 0
      %p139 = por %p137, %p138
      %s140 = ssub.s32 %s34, %s41
      %p141 = scmp.eq.s32.totalorder %s140, 0
      %s143 = sadd.s32 %s142, 1
      %s144 = scalar_select %p141, %s142, %s143
      %p147 = pneg %p141
      %p148 = scmp.eq.s32.totalorder %s26, 3
      %p149 = por %p147, %p148
      %p150 = scmp.ne.s32.totalorder %s142, %s145
      %p151 = scmp.eq.s32.totalorder %s26, 0
      %p152 = por %p150, %p151
      %p153 = scmp.ne.s32.totalorder %s142, %s145
      %p154 = scmp.eq.s32.totalorder %s31, 3
      %p155 = por %p153, %p154
      %p156 = scmp.ne.s32.totalorder %s145, %s146
      %p157 = scmp.eq.s32.totalorder %s31, 0
      %p158 = por %p156, %p157
      %p159 = scmp.ne.s32.totalorder %s145, %s146
      %p160 = scmp.eq.s32.totalorder %s32, 3
      %p161 = por %p159, %p160
      %p163 = scmp.ne.s32.totalorder %s146, %s162
      %p164 = scmp.eq.s32.totalorder %s32, 0
      %p165 = por %p163, %p164
      %s166 = ssub.s32 %s34, %s41
      %p167 = scmp.eq.s32.totalorder %s166, 0
      %s169 = sadd.s32 %s168, 1
      %s170 = scalar_select %p167, %s168, %s169
      %p173 = pneg %p167
      %p174 = scmp.eq.s32.totalorder %s26, 3
      %p175 = por %p173, %p174
      %p176 = scmp.ne.s32.totalorder %s168, %s171
      %p177 = scmp.eq.s32.totalorder %s26, 0
      %p178 = por %p176, %p177
      %p179 = scmp.ne.s32.totalorder %s168, %s171
      %p180 = scmp.eq.s32.totalorder %s31, 3
      %p181 = por %p179, %p180
      %p182 = scmp.ne.s32.totalorder %s171, %s172
      %p183 = scmp.eq.s32.totalorder %s31, 0
      %p184 = por %p182, %p183
      %p185 = scmp.ne.s32.totalorder %s171, %s172
      %p186 = scmp.eq.s32.totalorder %s32, 3
      %p187 = por %p185, %p186
      %p189 = scmp.ne.s32.totalorder %s172, %s188
      %p190 = scmp.eq.s32.totalorder %s32, 0
      %p191 = por %p189, %p190
      %s192 = ssub.s32 %s34, %s41
      %p193 = scmp.eq.s32.totalorder %s192, 0
      %s195 = sadd.s32 %s194, 1
      %s196 = scalar_select %p193, %s194, %s195
      %p199 = pneg %p193
      %p200 = scmp.eq.s32.totalorder %s26, 3
      %p201 = por %p199, %p200
      %p202 = scmp.ne.s32.totalorder %s194, %s197
      %p203 = scmp.eq.s32.totalorder %s26, 0
      %p204 = por %p202, %p203
      %p205 = scmp.ne.s32.totalorder %s194, %s197
      %p206 = scmp.eq.s32.totalorder %s31, 3
      %p207 = por %p205, %p206
      %p208 = scmp.ne.s32.totalorder %s197, %s198
      %p209 = scmp.eq.s32.totalorder %s31, 0
      %p210 = por %p208, %p209
      %p211 = scmp.ne.s32.totalorder %s197, %s198
      %p212 = scmp.eq.s32.totalorder %s32, 3
      %p213 = por %p211, %p212
      %p215 = scmp.ne.s32.totalorder %s198, %s214
      %p216 = scmp.eq.s32.totalorder %s32, 0
      %p217 = por %p215, %p216
      %s218 = ssub.s32 %s34, %s41
      %p219 = scmp.eq.s32.totalorder %s218, 0
      %s221 = sadd.s32 %s220, 1
      %s222 = scalar_select %p219, %s220, %s221
      %p225 = pneg %p219
      %p226 = scmp.eq.s32.totalorder %s26, 3
      %p227 = por %p225, %p226
      %p228 = scmp.ne.s32.totalorder %s220, %s223
      %p229 = scmp.eq.s32.totalorder %s26, 0
      %p230 = por %p228, %p229
      %p231 = scmp.ne.s32.totalorder %s220, %s223
      %p232 = scmp.eq.s32.totalorder %s31, 3
      %p233 = por %p231, %p232
      %p234 = scmp.ne.s32.totalorder %s223, %s224
      %p235 = scmp.eq.s32.totalorder %s31, 0
      %p236 = por %p234, %p235
      %p237 = scmp.ne.s32.totalorder %s223, %s224
      %p238 = scmp.eq.s32.totalorder %s32, 3
      %p239 = por %p237, %p238
      %p241 = scmp.ne.s32.totalorder %s224, %s240
      %p242 = scmp.eq.s32.totalorder %s32, 0
      %p243 = por %p241, %p242
      %s245 = sadd.s32 %s244, 1
      %p248 = scmp.eq.s32.totalorder %s26, 3
      %p249 = scmp.ne.s32.totalorder %s244, %s246
      %p250 = scmp.eq.s32.totalorder %s26, 0
      %p251 = por %p249, %p250
      %p252 = scmp.ne.s32.totalorder %s244, %s246
      %p253 = scmp.eq.s32.totalorder %s31, 3
      %p254 = por %p252, %p253
      %p255 = scmp.ne.s32.totalorder %s246, %s247
      %p256 = scmp.eq.s32.totalorder %s31, 0
      %p257 = por %p255, %p256
      %p258 = scmp.ne.s32.totalorder %s246, %s247
      %p259 = scmp.eq.s32.totalorder %s32, 3
      %p260 = por %p258, %p259
      %p262 = scmp.ne.s32.totalorder %s247, %s261
      %p263 = scmp.eq.s32.totalorder %s32, 0
      %p264 = por %p262, %p263
      %s266 = sadd.s32 %s265, 1
      %p269 = scmp.eq.s32.totalorder %s26, 3
      %p270 = scmp.ne.s32.totalorder %s265, %s267
      %p271 = scmp.eq.s32.totalorder %s26, 0
      %p272 = por %p270, %p271
      %p273 = scmp.ne.s32.totalorder %s265, %s267
      %p274 = scmp.eq.s32.totalorder %s31, 3
      %p275 = por %p273, %p274
      %p276 = scmp.ne.s32.totalorder %s267, %s268
      %p277 = scmp.eq.s32.totalorder %s31, 0
      %p278 = por %p276, %p277
      %p279 = scmp.ne.s32.totalorder %s267, %s268
      %p280 = scmp.eq.s32.totalorder %s32, 3
      %p281 = por %p279, %p280
      %p283 = scmp.ne.s32.totalorder %s268, %s282
      %p284 = scmp.eq.s32.totalorder %s32, 0
      %p285 = por %p283, %p284
      %s286 = ssub.s32 %s33, %s45
      %p287 = scmp.eq.s32.totalorder %s286, 0
      %s289 = sadd.s32 %s288, 1
      %s290 = scalar_select %p287, %s288, %s289
      %p293 = pneg %p287
      %p294 = scmp.eq.s32.totalorder %s26, 3
      %p295 = por %p293, %p294
      %p296 = scmp.ne.s32.totalorder %s288, %s291
      %p297 = scmp.eq.s32.totalorder %s26, 0
      %p298 = por %p296, %p297
      %p299 = scmp.ne.s32.totalorder %s288, %s291
      %p300 = scmp.eq.s32.totalorder %s31, 3
      %p301 = por %p299, %p300
      %p302 = scmp.ne.s32.totalorder %s291, %s292
      %p303 = scmp.eq.s32.totalorder %s31, 0
      %p304 = por %p302, %p303
      %p305 = scmp.ne.s32.totalorder %s291, %s292
      %p306 = scmp.eq.s32.totalorder %s32, 3
      %p307 = por %p305, %p306
      %p309 = scmp.ne.s32.totalorder %s292, %s308
      %p310 = scmp.eq.s32.totalorder %s32, 0
      %p311 = por %p309, %p310
      %p312 = scmp.le.s32.totalorder 1, %s26
      %p313 = scmp.lt.s32.totalorder %s26, 5
      %p314 = pnand %p312, %p313
      %p315 = pneg %p314
      // Predicated region
      $region9: #{tpu_custom_call.1} parent=5 // pred_check
        _
      $region10: #{tpu_custom_call.1} parent=5 // pred_check_branch
        %317 = sbr.rel (%p314) target = $region12
      $region11: #{tpu_custom_call.1} parent=5 // pred_region
        %s318 = ssub.s32 %s26, 1
        // Predicated region
        $region13: #{tpu_custom_call.1} parent=11 // pred_check
          %p319 = pneg %p85
        $region14: #{tpu_custom_call.1} parent=11 // pred_check_branch
          %321 = sbr.rel (%p319) target = $region16
        $region15: #{tpu_custom_call.1} parent=11 // pred_region
          %323 = vsyncadd [#allocation4], 0
          %s324 = sshll.u32 %s1, 4
          %s325 = int_to_ptr.hbm [resolvable:$true] %s324
          %s326 = sshll.u32 [#allocation3], 4
          %s327 = int_to_ptr.vmem [resolvable:$true] %s326
          %332 = dma.hbm_to_vmem [thread:$0]  %s325, 2048, %s327, [#allocation4], 128, 128, 8
        $region16: #{tpu_custom_call.1} parent=11 // pred_fallthru
          _
        // Predicated region
        $region17: #{tpu_custom_call.1} parent=11 // pred_check
          %p333 = pneg %p106
        $region18: #{tpu_custom_call.1} parent=11 // pred_check_branch
          %335 = sbr.rel (%p333) target = $region20
        $region19: #{tpu_custom_call.1} parent=11 // pred_region
          _
        $region20: #{tpu_custom_call.1} parent=11 // pred_fallthru
          _
        // Predicated region
        $region21: #{tpu_custom_call.1} parent=11 // pred_check
          %p336 = pneg %p257
        $region22: #{tpu_custom_call.1} parent=11 // pred_check_branch
          %338 = sbr.rel (%p336) target = $region24
        $region23: #{tpu_custom_call.1} parent=11 // pred_region
          %340 = vsyncadd [#allocation10], 0
          %s341 = sshll.u32 %s8, 4
          %s342 = int_to_ptr.hbm [resolvable:$true] %s341
          %s343 = sshll.u32 [#allocation11], 4
          %s344 = int_to_ptr.vmem [resolvable:$true] %s343
          %349 = dma.hbm_to_vmem [thread:$0]  %s342, 2048, %s344, [#allocation10], 128, 128, 8
        $region24: #{tpu_custom_call.1} parent=11 // pred_fallthru
          _
        // Predicated region
        $region25: #{tpu_custom_call.1} parent=11 // pred_check
          %p350 = pneg %p278
        $region26: #{tpu_custom_call.1} parent=11 // pred_check_branch
          %352 = sbr.rel (%p350) target = $region28
        $region27: #{tpu_custom_call.1} parent=11 // pred_region
          _
        $region28: #{tpu_custom_call.1} parent=11 // pred_fallthru
          _
      $region12: #{tpu_custom_call.1} parent=5 // pred_fallthru
        _
      %p353 = scmp.lt.s32.totalorder %s26, 4
      // Predicated region
      $region29: #{tpu_custom_call.1} parent=5 // pred_check
        %p354 = pneg %p353
      $region30: #{tpu_custom_call.1} parent=5 // pred_check_branch
        %356 = sbr.rel (%p354) target = $region32
      $region31: #{tpu_custom_call.1} parent=5 // pred_region
        // Predicated region
        $region33: #{tpu_custom_call.1} parent=31 // pred_check
          %p357 = pneg %p58
        $region34: #{tpu_custom_call.1} parent=31 // pred_check_branch
          %359 = sbr.rel (%p357) target = $region36
        $region35: #{tpu_custom_call.1} parent=31 // pred_region
          %p360 = scmp.lt.s32.totalorder %s33, 1
          %s361 = scalar_select %p360, %s33, 1
          %s362 = smul.addr %s361, 2
          %s363 = smul.addr %s362, 8
          %s364 = scalar_lea.vmem %s0, %s363
        $region36: #{tpu_custom_call.1} parent=31 // pred_fallthru
          _
        // Predicated region
        $region37: #{tpu_custom_call.1} parent=31 // pred_check
          %p365 = pneg %p126
        $region38: #{tpu_custom_call.1} parent=31 // pred_check_branch
          %367 = sbr.rel (%p365) target = $region40
        $region39: #{tpu_custom_call.1} parent=31 // pred_region
          %p368 = scmp.lt.s32.totalorder %s34, 1
          %s369 = scalar_select %p368, %s34, 1
          %s370 = smul.addr %s369, 16
          %s371 = smul.addr %s370, 8
          %s372 = scalar_lea.vmem %s3, %s371
        $region40: #{tpu_custom_call.1} parent=31 // pred_fallthru
          _
        // Predicated region
        $region41: #{tpu_custom_call.1} parent=31 // pred_check
          %p373 = pneg %p152
        $region42: #{tpu_custom_call.1} parent=31 // pred_check_branch
          %375 = sbr.rel (%p373) target = $region44
        $region43: #{tpu_custom_call.1} parent=31 // pred_region
          %s376 = sand.u32 %s26, 1
          %s377 = scalar_lea.sflag [#allocation7], %s376
          %s378 = sand.u32 %s142, 1
          %s379 = smul.addr %s378, 16
          %s380 = scalar_lea.vmem [#allocation6], %s379
          %382 = vsyncadd %s377, 0
          %s383 = smul.addr %s34, 2
          %s384 = smul.addr %s383, 8
          %s385 = scalar_lea.hbm %s4, %s384
          %s386 = sshll.u32 %s385, 4
          %s387 = int_to_ptr.hbm [resolvable:$true] %s386
          %s388 = sshll.u32 %s380, 4
          %s389 = int_to_ptr.vmem [resolvable:$true] %s388
          %394 = dma.hbm_to_vmem [thread:$0]  %s387, 256, %s389, %s377, 128, 128, 8
        $region44: #{tpu_custom_call.1} parent=31 // pred_fallthru
          _
        // Predicated region
        $region45: #{tpu_custom_call.1} parent=31 // pred_check
          %p395 = pneg %p178
        $region46: #{tpu_custom_call.1} parent=31 // pred_check_branch
          %397 = sbr.rel (%p395) target = $region48
        $region47: #{tpu_custom_call.1} parent=31 // pred_region
          %p398 = scmp.lt.s32.totalorder %s34, 1
          %s399 = scalar_select %p398, %s34, 1
          %s400 = smul.addr %s399, 16
          %s401 = smul.addr %s400, 8
          %s402 = scalar_lea.vmem %s5, %s401
        $region48: #{tpu_custom_call.1} parent=31 // pred_fallthru
          _
        // Predicated region
        $region49: #{tpu_custom_call.1} parent=31 // pred_check
          %p403 = pneg %p204
        $region50: #{tpu_custom_call.1} parent=31 // pred_check_branch
          %405 = sbr.rel (%p403) target = $region52
        $region51: #{tpu_custom_call.1} parent=31 // pred_region
          %s406 = sand.u32 %s26, 1
          %s407 = scalar_lea.sflag [#allocation7], %s406
          %s408 = sand.u32 %s194, 1
          %s409 = smul.addr %s408, 128
          %s410 = scalar_lea.vmem [#allocation8], %s409
          %412 = vsyncadd %s407, 0
          %s413 = smul.addr %s34, 16
          %s414 = smul.addr %s413, 8
          %s415 = scalar_lea.hbm %s6, %s414
          %s416 = sshll.u32 %s415, 4
          %s417 = int_to_ptr.hbm [resolvable:$true] %s416
          %s418 = sshll.u32 %s410, 4
          %s419 = int_to_ptr.vmem [resolvable:$true] %s418
          %424 = dma.hbm_to_vmem [thread:$0]  %s417, 2048, %s419, %s407, 128, 128, 8
        $region52: #{tpu_custom_call.1} parent=31 // pred_fallthru
          _
        // Predicated region
        $region53: #{tpu_custom_call.1} parent=31 // pred_check
          %p425 = pneg %p230
        $region54: #{tpu_custom_call.1} parent=31 // pred_check_branch
          %427 = sbr.rel (%p425) target = $region56
        $region55: #{tpu_custom_call.1} parent=31 // pred_region
          %s428 = sand.u32 %s26, 1
          %s429 = scalar_lea.sflag [#allocation10], %s428
          %s430 = sand.u32 %s220, 1
          %s431 = smul.addr %s430, 8
          %s432 = scalar_lea.vmem [#allocation9], %s431
          %434 = vsyncadd %s429, 0
          %s435 = smul.addr %s34, 8
          %s436 = scalar_lea.hbm %s7, %s435
          %s438 = sshll.u32 %s436, 4
          %s439 = int_to_ptr.hbm [resolvable:$true] %s438
          %s440 = sshll.u32 %s432, 4
          %s441 = int_to_ptr.vmem [resolvable:$true] %s440
          %443 = dma.hbm_to_vmem [thread:$0]  %s439, 128, %s441, %s429
        $region56: #{tpu_custom_call.1} parent=31 // pred_fallthru
          _
      $region32: #{tpu_custom_call.1} parent=5 // pred_fallthru
        _
      %p444 = scmp.le.s32.totalorder 1, %s26
      %p445 = scmp.lt.s32.totalorder %s26, 5
      %p446 = pnand %p444, %p445
      %p447 = pneg %p446
      // Predicated region
      $region57: #{tpu_custom_call.1} parent=5 // pred_check
        _
      $region58: #{tpu_custom_call.1} parent=5 // pred_check_branch
        %449 = sbr.rel (%p446) target = $region60
      $region59: #{tpu_custom_call.1} parent=5 // pred_region
        %s450 = ssub.s32 %s26, 1
        // Predicated region
        $region61: #{tpu_custom_call.1} parent=59 // pred_check
          %p451 = pneg %p85
        $region62: #{tpu_custom_call.1} parent=59 // pred_check_branch
          %453 = sbr.rel (%p451) target = $region64
        $region63: #{tpu_custom_call.1} parent=59 // pred_region
          %455 = dma.done [#allocation4], 2048
        $region64: #{tpu_custom_call.1} parent=59 // pred_fallthru
          _
        %s456 = sand.u32 %s31, 1
        %s457 = scalar_lea.sflag [#allocation7], %s456
        %s458 = sand.u32 %s145, 1
        %s459 = smul.addr %s458, 16
        %s460 = scalar_lea.vmem [#allocation6], %s459
        // Predicated region
        $region65: #{tpu_custom_call.1} parent=59 // pred_check
          %p461 = pneg %p158
        $region66: #{tpu_custom_call.1} parent=59 // pred_check_branch
          %463 = sbr.rel (%p461) target = $region68
        $region67: #{tpu_custom_call.1} parent=59 // pred_region
          %465 = dma.done %s457, 256
        $region68: #{tpu_custom_call.1} parent=59 // pred_fallthru
          _
        %s466 = sand.u32 %s31, 1
        %s467 = scalar_lea.sflag [#allocation7], %s466
        %s468 = sand.u32 %s197, 1
        %s469 = smul.addr %s468, 128
        %s470 = scalar_lea.vmem [#allocation8], %s469
        // Predicated region
        $region69: #{tpu_custom_call.1} parent=59 // pred_check
          %p471 = pneg %p210
        $region70: #{tpu_custom_call.1} parent=59 // pred_check_branch
          %473 = sbr.rel (%p471) target = $region72
        $region71: #{tpu_custom_call.1} parent=59 // pred_region
          %475 = dma.done %s467, 2048
        $region72: #{tpu_custom_call.1} parent=59 // pred_fallthru
          _
        %s476 = sand.u32 %s31, 1
        %s477 = scalar_lea.sflag [#allocation10], %s476
        %s478 = sand.u32 %s223, 1
        %s479 = smul.addr %s478, 8
        %s480 = scalar_lea.vmem [#allocation9], %s479
        // Predicated region
        $region73: #{tpu_custom_call.1} parent=59 // pred_check
          %p481 = pneg %p236
        $region74: #{tpu_custom_call.1} parent=59 // pred_check_branch
          %483 = sbr.rel (%p481) target = $region76
        $region75: #{tpu_custom_call.1} parent=59 // pred_region
          %485 = dma.done %s477, 128
        $region76: #{tpu_custom_call.1} parent=59 // pred_fallthru
          _
        // Predicated region
        $region77: #{tpu_custom_call.1} parent=59 // pred_check
          %p486 = pneg %p257
        $region78: #{tpu_custom_call.1} parent=59 // pred_check_branch
          %488 = sbr.rel (%p486) target = $region80
        $region79: #{tpu_custom_call.1} parent=59 // pred_region
          %490 = dma.done [#allocation10], 2048
        $region80: #{tpu_custom_call.1} parent=59 // pred_fallthru
          _
        %p491 = scmp.lt.s32.totalorder %s35, 1
        %s492 = scalar_select %p491, %s35, 1
        %s493 = smul.addr %s492, 2
        %s494 = smul.addr %s493, 8
        %s495 = scalar_lea.vmem %s0, %s494
        %p496 = pneg %p64
        %p497 = pneg %p61
        %p498 = pneg %p85
        %p499 = pneg %p82
        %p500 = pneg %p106
        %p501 = pneg %p103
        %p502 = scmp.lt.s32.totalorder %s36, 1
        %s503 = scalar_select %p502, %s36, 1
        %s504 = smul.addr %s503, 16
        %s505 = smul.addr %s504, 8
        %s506 = scalar_lea.vmem %s3, %s505
        %p507 = pneg %p132
        %p508 = pneg %p129
        %s509 = sand.u32 %s31, 1
        %s510 = scalar_lea.sflag [#allocation7], %s509
        %s511 = sand.u32 %s145, 1
        %s512 = smul.addr %s511, 16
        %s513 = scalar_lea.vmem [#allocation6], %s512
        %p514 = pneg %p158
        %p515 = pneg %p155
        %p516 = scmp.lt.s32.totalorder %s36, 1
        %s517 = scalar_select %p516, %s36, 1
        %s518 = smul.addr %s517, 16
        %s519 = smul.addr %s518, 8
        %s520 = scalar_lea.vmem %s5, %s519
        %p521 = pneg %p184
        %p522 = pneg %p181
        %s523 = sand.u32 %s31, 1
        %s524 = scalar_lea.sflag [#allocation7], %s523
        %s525 = sand.u32 %s197, 1
        %s526 = smul.addr %s525, 128
        %s527 = scalar_lea.vmem [#allocation8], %s526
        %p528 = pneg %p210
        %p529 = pneg %p207
        %s530 = sand.u32 %s31, 1
        %s531 = scalar_lea.sflag [#allocation10], %s530
        %s532 = sand.u32 %s223, 1
        %s533 = smul.addr %s532, 8
        %s534 = scalar_lea.vmem [#allocation9], %s533
        %p535 = pneg %p236
        %p536 = pneg %p233
        %p537 = pneg %p257
        %p538 = pneg %p254
        %p539 = pneg %p278
        %p540 = pneg %p275
        %p541 = pneg %p304
        %p542 = pneg %p301
        %s543 = sand.u32 %s291, 1
        %s544 = scalar_lea.sflag [#allocation5], %s543
        %s545 = sand.u32 %s291, 1
        %s546 = scalar_lea.vmem [#allocation12], %s545
        %p547 = scmp.lt.s32.totalorder %s35, 1
        %s548 = scalar_select %p547, %s35, 1
        %s549 = smul.addr %s548, 2
        %s550 = smul.addr %s549, 8
        %s551 = scalar_lea.vmem %s0, %s550
        %p552 = scmp.lt.s32.totalorder %s36, 1
        %s553 = scalar_select %p552, %s36, 1
        %s554 = smul.addr %s553, 16
        %s555 = smul.addr %s554, 8
        %s556 = scalar_lea.vmem %s3, %s555
        %p557 = scmp.lt.s32.totalorder %s36, 1
        %s558 = scalar_select %p557, %s36, 1
        %s559 = smul.addr %s558, 16
        %s560 = smul.addr %s559, 8
        %s561 = scalar_lea.vmem %s5, %s560
        %v562 = vlaneseq
        %v563 = vand.u32 %v562, 127
        %vm564 = vcmp.lt.s32.totalorder %v563, 32
        %v565 = vsel %vm564, 1, 0
        %v566 = vcvt.s32.f32 %v565
        %p567 = scmp.eq.s32.totalorder %s36, 0
        // Predicated region
        $region81: #{tpu_custom_call.1} parent=59 // pred_check
          %p568 = pneg %p567
        $region82: #{tpu_custom_call.1} parent=59 // pred_check_branch
          %570 = sbr.rel (%p568) target = $region84
        $region83: #{tpu_custom_call.1} parent=59 // pred_region
          %v571 = vld [vmem:[%s551] sm:$0xff]
          %v572 = vld [vmem:[%s551 + $0x8] sm:$0xff]
          %v573 = vld [vmem:[#allocation3] sm:$0xff]
          %v574 = vld [vmem:[#allocation3 + $0x8] sm:$0xff]
          %v575 = vld [vmem:[#allocation3 + $0x10] sm:$0xff]
          %v576 = vld [vmem:[#allocation3 + $0x18] sm:$0xff]
          %v577 = vld [vmem:[#allocation3 + $0x20] sm:$0xff]
          %v578 = vld [vmem:[#allocation3 + $0x28] sm:$0xff]
          %v579 = vld [vmem:[#allocation3 + $0x30] sm:$0xff]
          %v580 = vld [vmem:[#allocation3 + $0x38] sm:$0xff]
          %v581 = vld [vmem:[#allocation3 + $0x40] sm:$0xff]
          %v582 = vld [vmem:[#allocation3 + $0x48] sm:$0xff]
          %v583 = vld [vmem:[#allocation3 + $0x50] sm:$0xff]
          %v584 = vld [vmem:[#allocation3 + $0x58] sm:$0xff]
          %v585 = vld [vmem:[#allocation3 + $0x60] sm:$0xff]
          %v586 = vld [vmem:[#allocation3 + $0x68] sm:$0xff]
          %v587 = vld [vmem:[#allocation3 + $0x70] sm:$0xff]
          %v588 = vld [vmem:[#allocation3 + $0x78] sm:$0xff]
          %v589 = vld [vmem:[%s2] sm:$0x1]
          %v591 = vperm.slane %v589, 0
          %593 = vmatpush.msra.mxu0 %v588
          %594 = vmatpush.msra.mxu0 %v587
          %595 = vmatpush.msra.mxu0 %v586
          %596 = vmatpush.msra.mxu0 %v585
          %597 = vmatpush.msra.mxu0 %v584
          %598 = vmatpush.msra.mxu0 %v583
          %599 = vmatpush.msra.mxu0 %v582
          %600 = vmatpush.msra.mxu0 %v581
          %601 = vmatpush.msra.mxu0 %v580
          %602 = vmatpush.msra.mxu0 %v579
          %603 = vmatpush.msra.mxu0 %v578
          %604 = vmatpush.msra.mxu0 %v577
          %605 = vmatpush.msra.mxu0 %v576
          %606 = vmatpush.msra.mxu0 %v575
          %607 = vmatpush.msra.mxu0 %v574
          %608 = vmatpush.msra.mxu0 %v573
          %609 = vmatmul.f32.gmra.mxu0 %v571
          %v610 = vpop.f32.mrf.mxu0
          %v611 = vadd.f32 %v591, %v610
          %612 = vmatmul.f32.gmra.mxu0 %v572
          %v613 = vpop.f32.mrf.mxu0
          %v614 = vadd.f32 %v591, %v613
          %615 = vdwg.mxu0
          %616 = vst [vmem:[#allocation2] sm:$0xff] %v611
          %617 = vst [vmem:[#allocation2 + $0x8] sm:$0xff] %v614
        $region84: #{tpu_custom_call.1} parent=59 // pred_fallthru
          _
        %v618 = vld [vmem:[%s480] sm:$0xff]
        %v619 = vld [vmem:[#allocation2] sm:$0xff]
        %v620 = vld [vmem:[#allocation2 + $0x8] sm:$0xff]
        %621 = vadd.xlane.f32.xlu0 %v619
        %v622 = vpop.xlane.xlu0 %621
        %623 = vadd.xlane.f32.xlu0 %v620
        %v624 = vpop.xlane.xlu0 %623
        %v625 = vmul.f32 %v622, 0.03125
        %v626 = vmul.f32 %v624, 0.03125
        %v627 = vmul.f32 %v619, %v619
        %v628 = vmul.f32 %v620, %v620
        %629 = vadd.xlane.f32.xlu0 %v627
        %v630 = vpop.xlane.xlu0 %629
        %631 = vadd.xlane.f32.xlu0 %v628
        %v632 = vpop.xlane.xlu0 %631
        %v633 = vmul.f32 %v630, 0.03125
        %v634 = vmul.f32 %v632, 0.03125
        %v635 = vmul.f32 %v625, %v625
        %v636 = vmul.f32 %v626, %v626
        %v637 = vsub.f32 %v633, %v635
        %v638 = vsub.f32 %v634, %v636
        %v639 = vsub.f32 %v619, %v625
        %v640 = vsub.f32 %v620, %v626
        %v641 = vadd.f32 %v637, 1e-05
        %v642 = vadd.f32 %v638, 1e-05
        %v643 = vrsqrt.pop %v641
        %v644 = vmul.f32 %v643, %v641
        %v645 = vmul.f32 %v644, %v643
        %v646 = vmul.f32 0.5, %v645
        %v647 = vsub.f32 1.5, %v646
        %v648 = vmul.f32 %v643, %v647
        %vm649 = vweird.f32 %v641
        %vm650 = vweird.f32 %v643
        %vm651 = vmor %vm649, %vm650
        %v652 = vsel %vm651, %v643, %v648
        %v653 = vrsqrt.pop %v642
        %v654 = vmul.f32 %v653, %v642
        %v655 = vmul.f32 %v654, %v653
        %v656 = vmul.f32 0.5, %v655
        %v657 = vsub.f32 1.5, %v656
        %v658 = vmul.f32 %v653, %v657
        %vm659 = vweird.f32 %v642
        %vm660 = vweird.f32 %v653
        %vm661 = vmor %vm659, %vm660
        %v662 = vsel %vm661, %v653, %v658
        %v663 = vmul.f32 %v639, %v652
        %v664 = vmul.f32 %v640, %v662
        %v665 = vperm.slane %v618, 0
        %v666 = vmul.f32 %v663, %v665
        %v667 = vmul.f32 %v664, %v665
        %v668 = vperm.slane %v618, 1
        %v669 = vadd.f32 %v666, %v668
        %v670 = vadd.f32 %v667, %v668
        %v671 = vld [vmem:[%s556] sm:$0xff]
        %v672 = vld [vmem:[%s556 + $0x8] sm:$0xff]
        %v673 = vld [vmem:[%s556 + $0x10] sm:$0xff]
        %v674 = vld [vmem:[%s556 + $0x18] sm:$0xff]
        %v675 = vld [vmem:[%s556 + $0x20] sm:$0xff]
        %v676 = vld [vmem:[%s556 + $0x28] sm:$0xff]
        %v677 = vld [vmem:[%s556 + $0x30] sm:$0xff]
        %v678 = vld [vmem:[%s556 + $0x38] sm:$0xff]
        %v679 = vld [vmem:[%s556 + $0x40] sm:$0xff]
        %v680 = vld [vmem:[%s556 + $0x48] sm:$0xff]
        %v681 = vld [vmem:[%s556 + $0x50] sm:$0xff]
        %v682 = vld [vmem:[%s556 + $0x58] sm:$0xff]
        %v683 = vld [vmem:[%s556 + $0x60] sm:$0xff]
        %v684 = vld [vmem:[%s556 + $0x68] sm:$0xff]
        %v685 = vld [vmem:[%s556 + $0x70] sm:$0xff]
        %v686 = vld [vmem:[%s556 + $0x78] sm:$0xff]
        %v687 = vperm.slane %v618, 2
        %v688 = vlaneseq
        %v689 = vshrl.u32 %v688, 7
        %691 = vset.pattern.permute.xlu0 %v689
        %692 = vperm.xlu0 %691, %v687
        %v693 = vpop.permute.xlu0 %692
        %v694 = vlaneseq
        %v695 = vshrl.u32 %v694, 7
        %v696 = vadd.s32 %v695, 8
        %697 = vset.pattern.permute.xlu0 %v696
        %698 = vperm.xlu0 %697, %v687
        %v699 = vpop.permute.xlu0 %698
        %v700 = vlaneseq
        %v701 = vshrl.u32 %v700, 7
        %v702 = vadd.s32 %v701, 16
        %703 = vset.pattern.permute.xlu0 %v702
        %704 = vperm.xlu0 %703, %v687
        %v705 = vpop.permute.xlu0 %704
        %v706 = vlaneseq
        %v707 = vshrl.u32 %v706, 7
        %v708 = vadd.s32 %v707, 24
        %709 = vset.pattern.permute.xlu0 %v708
        %710 = vperm.xlu0 %709, %v687
        %v711 = vpop.permute.xlu0 %710
        %v712 = vlaneseq
        %v713 = vshrl.u32 %v712, 7
        %v714 = vadd.s32 %v713, 32
        %715 = vset.pattern.permute.xlu0 %v714
        %716 = vperm.xlu0 %715, %v687
        %v717 = vpop.permute.xlu0 %716
        %v718 = vlaneseq
        %v719 = vshrl.u32 %v718, 7
        %v720 = vadd.s32 %v719, 40
        %721 = vset.pattern.permute.xlu0 %v720
        %722 = vperm.xlu0 %721, %v687
        %v723 = vpop.permute.xlu0 %722
        %v724 = vlaneseq
        %v725 = vshrl.u32 %v724, 7
        %v726 = vadd.s32 %v725, 48
        %727 = vset.pattern.permute.xlu0 %v726
        %728 = vperm.xlu0 %727, %v687
        %v729 = vpop.permute.xlu0 %728
        %v730 = vlaneseq
        %v731 = vshrl.u32 %v730, 7
        %v732 = vadd.s32 %v731, 56
        %733 = vset.pattern.permute.xlu0 %v732
        %734 = vperm.xlu0 %733, %v687
        %v735 = vpop.permute.xlu0 %734
        %v736 = vlaneseq
        %v737 = vshrl.u32 %v736, 7
        %v738 = vadd.s32 %v737, 64
        %739 = vset.pattern.permute.xlu0 %v738
        %740 = vperm.xlu0 %739, %v687
        %v741 = vpop.permute.xlu0 %740
        %v742 = vlaneseq
        %v743 = vshrl.u32 %v742, 7
        %v744 = vadd.s32 %v743, 72
        %745 = vset.pattern.permute.xlu0 %v744
        %746 = vperm.xlu0 %745, %v687
        %v747 = vpop.permute.xlu0 %746
        %v748 = vlaneseq
        %v749 = vshrl.u32 %v748, 7
        %v750 = vadd.s32 %v749, 80
        %751 = vset.pattern.permute.xlu0 %v750
        %752 = vperm.xlu0 %751, %v687
        %v753 = vpop.permute.xlu0 %752
        %v754 = vlaneseq
        %v755 = vshrl.u32 %v754, 7
        %v756 = vadd.s32 %v755, 88
        %757 = vset.pattern.permute.xlu0 %v756
        %758 = vperm.xlu0 %757, %v687
        %v759 = vpop.permute.xlu0 %758
        %v760 = vlaneseq
        %v761 = vshrl.u32 %v760, 7
        %v762 = vadd.s32 %v761, 96
        %763 = vset.pattern.permute.xlu0 %v762
        %764 = vperm.xlu0 %763, %v687
        %v765 = vpop.permute.xlu0 %764
        %v766 = vlaneseq
        %v767 = vshrl.u32 %v766, 7
        %v768 = vadd.s32 %v767, 104
        %769 = vset.pattern.permute.xlu0 %v768
        %770 = vperm.xlu0 %769, %v687
        %v771 = vpop.permute.xlu0 %770
        %v772 = vlaneseq
        %v773 = vshrl.u32 %v772, 7
        %v774 = vadd.s32 %v773, 112
        %775 = vset.pattern.permute.xlu0 %v774
        %776 = vperm.xlu0 %775, %v687
        %v777 = vpop.permute.xlu0 %776
        %v778 = vlaneseq
        %v779 = vshrl.u32 %v778, 7
        %v780 = vadd.s32 %v779, 120
        %781 = vset.pattern.permute.xlu0 %v780
        %782 = vperm.xlu0 %781, %v687
        %v783 = vpop.permute.xlu0 %782
        %vm784 = vcmask 130048
        %v786 = vsel %vm784, %v671, 0
        %v789 = vsel %vm784, %v672, 0
        %v792 = vsel %vm784, %v673, 0
        %v795 = vsel %vm784, %v674, 0
        %v798 = vsel %vm784, %v675, 0
        %v801 = vsel %vm784, %v676, 0
        %v804 = vsel %vm784, %v677, 0
        %v807 = vsel %vm784, %v678, 0
        %v810 = vsel %vm784, %v679, 0
        %v813 = vsel %vm784, %v680, 0
        %v816 = vsel %vm784, %v681, 0
        %v819 = vsel %vm784, %v682, 0
        %v822 = vsel %vm784, %v683, 0
        %v825 = vsel %vm784, %v684, 0
        %v828 = vsel %vm784, %v685, 0
        %v831 = vsel %vm784, %v686, 0
        %833 = vmatpush.msra.mxu0 0.0
        %834 = vmatpush.msra.mxu0 0.0
        %835 = vmatpush.msra.mxu0 0.0
        %836 = vmatpush.msra.mxu0 0.0
        %837 = vmatpush.msra.mxu0 0.0
        %838 = vmatpush.msra.mxu0 0.0
        %839 = vmatpush.msra.mxu0 0.0
        %840 = vmatpush.msra.mxu0 0.0
        %841 = vmatpush.msra.mxu0 0.0
        %842 = vmatpush.msra.mxu0 0.0
        %843 = vmatpush.msra.mxu0 0.0
        %844 = vmatpush.msra.mxu0 0.0
        %845 = vmatpush.msra.mxu0 0.0
        %846 = vmatpush.msra.mxu0 0.0
        %847 = vmatpush.msra.mxu0 %v670
        %848 = vmatpush.msra.mxu0 %v669
        %849 = vmatmul.f32.gmra.mxu0 %v786
        %v850 = vpop.f32.mrf.mxu0
        %v851 = vadd.f32 %v693, %v850
        %852 = vmatmul.f32.gmra.mxu0 %v789
        %v853 = vpop.f32.mrf.mxu0
        %v854 = vadd.f32 %v699, %v853
        %855 = vmatmul.f32.gmra.mxu0 %v792
        %v856 = vpop.f32.mrf.mxu0
        %v857 = vadd.f32 %v705, %v856
        %858 = vmatmul.f32.gmra.mxu0 %v795
        %v859 = vpop.f32.mrf.mxu0
        %v860 = vadd.f32 %v711, %v859
        %861 = vmatmul.f32.gmra.mxu0 %v798
        %v862 = vpop.f32.mrf.mxu0
        %v863 = vadd.f32 %v717, %v862
        %864 = vmatmul.f32.gmra.mxu0 %v801
        %v865 = vpop.f32.mrf.mxu0
        %v866 = vadd.f32 %v723, %v865
        %867 = vmatmul.f32.gmra.mxu0 %v804
        %v868 = vpop.f32.mrf.mxu0
        %v869 = vadd.f32 %v729, %v868
        %870 = vmatmul.f32.gmra.mxu0 %v807
        %v871 = vpop.f32.mrf.mxu0
        %v872 = vadd.f32 %v735, %v871
        %873 = vmatmul.f32.gmra.mxu0 %v810
        %v874 = vpop.f32.mrf.mxu0
        %v875 = vadd.f32 %v741, %v874
        %876 = vmatmul.f32.gmra.mxu0 %v813
        %v877 = vpop.f32.mrf.mxu0
        %v878 = vadd.f32 %v747, %v877
        %879 = vmatmul.f32.gmra.mxu0 %v816
        %v880 = vpop.f32.mrf.mxu0
        %v881 = vadd.f32 %v753, %v880
        %882 = vmatmul.f32.gmra.mxu0 %v819
        %v883 = vpop.f32.mrf.mxu0
        %v884 = vadd.f32 %v759, %v883
        %885 = vmatmul.f32.gmra.mxu0 %v822
        %v886 = vpop.f32.mrf.mxu0
        %v887 = vadd.f32 %v765, %v886
        %888 = vmatmul.f32.gmra.mxu0 %v825
        %v889 = vpop.f32.mrf.mxu0
        %v890 = vadd.f32 %v771, %v889
        %891 = vmatmul.f32.gmra.mxu0 %v828
        %v892 = vpop.f32.mrf.mxu0
        %v893 = vadd.f32 %v777, %v892
        %894 = vmatmul.f32.gmra.mxu0 %v831
        %v895 = vpop.f32.mrf.mxu0
        %v896 = vadd.f32 %v783, %v895
        %897 = vdwg.mxu0
        %v898 = vmul.f32 %v851, %v851
        %v899 = vmul.f32 %v854, %v854
        %v900 = vmul.f32 %v857, %v857
        %v901 = vmul.f32 %v860, %v860
        %v902 = vmul.f32 %v863, %v863
        %v903 = vmul.f32 %v866, %v866
        %v904 = vmul.f32 %v869, %v869
        %v905 = vmul.f32 %v872, %v872
        %v906 = vmul.f32 %v875, %v875
        %v907 = vmul.f32 %v878, %v878
        %v908 = vmul.f32 %v881, %v881
        %v909 = vmul.f32 %v884, %v884
        %v910 = vmul.f32 %v887, %v887
        %v911 = vmul.f32 %v890, %v890
        %v912 = vmul.f32 %v893, %v893
        %v913 = vmul.f32 %v896, %v896
        %v914 = vmul.f32 %v851, %v898
        %v915 = vmul.f32 %v854, %v899
        %v916 = vmul.f32 %v857, %v900
        %v917 = vmul.f32 %v860, %v901
        %v918 = vmul.f32 %v863, %v902
        %v919 = vmul.f32 %v866, %v903
        %v920 = vmul.f32 %v869, %v904
        %v921 = vmul.f32 %v872, %v905
        %v922 = vmul.f32 %v875, %v906
        %v923 = vmul.f32 %v878, %v907
        %v924 = vmul.f32 %v881, %v908
        %v925 = vmul.f32 %v884, %v909
        %v926 = vmul.f32 %v887, %v910
        %v927 = vmul.f32 %v890, %v911
        %v928 = vmul.f32 %v893, %v912
        %v929 = vmul.f32 %v896, %v913
        %v930 = vmul.f32 %v914, 0.044715
        %v931 = vmul.f32 %v915, 0.044715
        %v932 = vmul.f32 %v916, 0.044715
        %v933 = vmul.f32 %v917, 0.044715
        %v934 = vmul.f32 %v918, 0.044715
        %v935 = vmul.f32 %v919, 0.044715
        %v936 = vmul.f32 %v920, 0.044715
        %v937 = vmul.f32 %v921, 0.044715
        %v938 = vmul.f32 %v922, 0.044715
        %v939 = vmul.f32 %v923, 0.044715
        %v940 = vmul.f32 %v924, 0.044715
        %v941 = vmul.f32 %v925, 0.044715
        %v942 = vmul.f32 %v926, 0.044715
        %v943 = vmul.f32 %v927, 0.044715
        %v944 = vmul.f32 %v928, 0.044715
        %v945 = vmul.f32 %v929, 0.044715
        %v946 = vadd.f32 %v851, %v930
        %v947 = vadd.f32 %v854, %v931
        %v948 = vadd.f32 %v857, %v932
        %v949 = vadd.f32 %v860, %v933
        %v950 = vadd.f32 %v863, %v934
        %v951 = vadd.f32 %v866, %v935
        %v952 = vadd.f32 %v869, %v936
        %v953 = vadd.f32 %v872, %v937
        %v954 = vadd.f32 %v875, %v938
        %v955 = vadd.f32 %v878, %v939
        %v956 = vadd.f32 %v881, %v940
        %v957 = vadd.f32 %v884, %v941
        %v958 = vadd.f32 %v887, %v942
        %v959 = vadd.f32 %v890, %v943
        %v960 = vadd.f32 %v893, %v944
        %v961 = vadd.f32 %v896, %v945
        %v962 = vmul.f32 %v946, 0.7978846
        %v963 = vmul.f32 %v947, 0.7978846
        %v964 = vmul.f32 %v948, 0.7978846
        %v965 = vmul.f32 %v949, 0.7978846
        %v966 = vmul.f32 %v950, 0.7978846
        %v967 = vmul.f32 %v951, 0.7978846
        %v968 = vmul.f32 %v952, 0.7978846
        %v969 = vmul.f32 %v953, 0.7978846
        %v970 = vmul.f32 %v954, 0.7978846
        %v971 = vmul.f32 %v955, 0.7978846
        %v972 = vmul.f32 %v956, 0.7978846
        %v973 = vmul.f32 %v957, 0.7978846
        %v974 = vmul.f32 %v958, 0.7978846
        %v975 = vmul.f32 %v959, 0.7978846
        %v976 = vmul.f32 %v960, 0.7978846
        %v977 = vmul.f32 %v961, 0.7978846
        %v978 = vtanh.pop %v962
        %v979 = vtanh.pop %v963
        %v980 = vtanh.pop %v964
        %v981 = vtanh.pop %v965
        %v982 = vtanh.pop %v966
        %v983 = vtanh.pop %v967
        %v984 = vtanh.pop %v968
        %v985 = vtanh.pop %v969
        %v986 = vtanh.pop %v970
        %v987 = vtanh.pop %v971
        %v988 = vtanh.pop %v972
        %v989 = vtanh.pop %v973
        %v990 = vtanh.pop %v974
        %v991 = vtanh.pop %v975
        %v992 = vtanh.pop %v976
        %v993 = vtanh.pop %v977
        %v994 = vadd.f32 %v978, 1.0
        %v995 = vadd.f32 %v979, 1.0
        %v996 = vadd.f32 %v980, 1.0
        %v997 = vadd.f32 %v981, 1.0
        %v998 = vadd.f32 %v982, 1.0
        %v999 = vadd.f32 %v983, 1.0
        %v1000 = vadd.f32 %v984, 1.0
        %v1001 = vadd.f32 %v985, 1.0
        %v1002 = vadd.f32 %v986, 1.0
        %v1003 = vadd.f32 %v987, 1.0
        %v1004 = vadd.f32 %v988, 1.0
        %v1005 = vadd.f32 %v989, 1.0
        %v1006 = vadd.f32 %v990, 1.0
        %v1007 = vadd.f32 %v991, 1.0
        %v1008 = vadd.f32 %v992, 1.0
        %v1009 = vadd.f32 %v993, 1.0
        %v1010 = vmul.f32 %v994, 0.5
        %v1011 = vmul.f32 %v995, 0.5
        %v1012 = vmul.f32 %v996, 0.5
        %v1013 = vmul.f32 %v997, 0.5
        %v1014 = vmul.f32 %v998, 0.5
        %v1015 = vmul.f32 %v999, 0.5
        %v1016 = vmul.f32 %v1000, 0.5
        %v1017 = vmul.f32 %v1001, 0.5
        %v1018 = vmul.f32 %v1002, 0.5
        %v1019 = vmul.f32 %v1003, 0.5
        %v1020 = vmul.f32 %v1004, 0.5
        %v1021 = vmul.f32 %v1005, 0.5
        %v1022 = vmul.f32 %v1006, 0.5
        %v1023 = vmul.f32 %v1007, 0.5
        %v1024 = vmul.f32 %v1008, 0.5
        %v1025 = vmul.f32 %v1009, 0.5
        %v1026 = vmul.f32 %v851, %v1010
        %v1027 = vmul.f32 %v854, %v1011
        %v1028 = vmul.f32 %v857, %v1012
        %v1029 = vmul.f32 %v860, %v1013
        %v1030 = vmul.f32 %v863, %v1014
        %v1031 = vmul.f32 %v866, %v1015
        %v1032 = vmul.f32 %v869, %v1016
        %v1033 = vmul.f32 %v872, %v1017
        %v1034 = vmul.f32 %v875, %v1018
        %v1035 = vmul.f32 %v878, %v1019
        %v1036 = vmul.f32 %v881, %v1020
        %v1037 = vmul.f32 %v884, %v1021
        %v1038 = vmul.f32 %v887, %v1022
        %v1039 = vmul.f32 %v890, %v1023
        %v1040 = vmul.f32 %v893, %v1024
        %v1041 = vmul.f32 %v896, %v1025
        %v1042 = vld [vmem:[%s460] sm:$0xff]
        %v1043 = vld [vmem:[%s460 + $0x8] sm:$0xff]
        %v1044 = vperm.slane %v618, 3
        %v1045 = vlaneseq
        %v1046 = vshrl.u32 %v1045, 7
        %1048 = vset.pattern.permute.xlu0 %v1046
        %1049 = vperm.xlu0 %1048, %v1044
        %v1050 = vpop.permute.xlu0 %1049
        %v1051 = vlaneseq
        %v1052 = vshrl.u32 %v1051, 7
        %v1053 = vadd.s32 %v1052, 8
        %1054 = vset.pattern.permute.xlu0 %v1053
        %1055 = vperm.xlu0 %1054, %v1044
        %v1056 = vpop.permute.xlu0 %1055
        %1057 = vmatpush.msra.mxu0 %v1041
        %1058 = vmatpush.msra.mxu0 %v1040
        %1059 = vmatpush.msra.mxu0 %v1039
        %1060 = vmatpush.msra.mxu0 %v1038
        %1061 = vmatpush.msra.mxu0 %v1037
        %1062 = vmatpush.msra.mxu0 %v1036
        %1063 = vmatpush.msra.mxu0 %v1035
        %1064 = vmatpush.msra.mxu0 %v1034
        %1065 = vmatpush.msra.mxu0 %v1033
        %1066 = vmatpush.msra.mxu0 %v1032
        %1067 = vmatpush.msra.mxu0 %v1031
        %1068 = vmatpush.msra.mxu0 %v1030
        %1069 = vmatpush.msra.mxu0 %v1029
        %1070 = vmatpush.msra.mxu0 %v1028
        %1071 = vmatpush.msra.mxu0 %v1027
        %1072 = vmatpush.msra.mxu0 %v1026
        %1073 = vmatmul.f32.gmra.mxu0 %v1042
        %v1074 = vpop.f32.mrf.mxu0
        %v1075 = vadd.f32 %v1050, %v1074
        %1076 = vmatmul.f32.gmra.mxu0 %v1043
        %v1077 = vpop.f32.mrf.mxu0
        %v1078 = vadd.f32 %v1056, %v1077
        %1079 = vdwg.mxu0
        %v1080 = vmul.f32 %v1075, %v566
        %v1081 = vmul.f32 %v1078, %v566
        %v1082 = vadd.f32 %v619, %v1080
        %v1083 = vadd.f32 %v620, %v1081
        %1084 = vadd.xlane.f32.xlu0 %v1082
        %v1085 = vpop.xlane.xlu0 %1084
        %1086 = vadd.xlane.f32.xlu0 %v1083
        %v1087 = vpop.xlane.xlu0 %1086
        %v1088 = vmul.f32 %v1085, 0.03125
        %v1089 = vmul.f32 %v1087, 0.03125
        %v1090 = vmul.f32 %v1082, %v1082
        %v1091 = vmul.f32 %v1083, %v1083
        %1092 = vadd.xlane.f32.xlu0 %v1090
        %v1093 = vpop.xlane.xlu0 %1092
        %1094 = vadd.xlane.f32.xlu0 %v1091
        %v1095 = vpop.xlane.xlu0 %1094
        %v1096 = vmul.f32 %v1093, 0.03125
        %v1097 = vmul.f32 %v1095, 0.03125
        %v1098 = vmul.f32 %v1088, %v1088
        %v1099 = vmul.f32 %v1089, %v1089
        %v1100 = vsub.f32 %v1096, %v1098
        %v1101 = vsub.f32 %v1097, %v1099
        %v1102 = vsub.f32 %v1082, %v1088
        %v1103 = vsub.f32 %v1083, %v1089
        %v1104 = vadd.f32 %v1100, 1e-05
        %v1105 = vadd.f32 %v1101, 1e-05
        %v1106 = vrsqrt.pop %v1104
        %v1107 = vmul.f32 %v1106, %v1104
        %v1108 = vmul.f32 %v1107, %v1106
        %v1109 = vmul.f32 0.5, %v1108
        %v1110 = vsub.f32 1.5, %v1109
        %v1111 = vmul.f32 %v1106, %v1110
        %vm1112 = vweird.f32 %v1104
        %vm1113 = vweird.f32 %v1106
        %vm1114 = vmor %vm1112, %vm1113
        %v1115 = vsel %vm1114, %v1106, %v1111
        %v1116 = vrsqrt.pop %v1105
        %v1117 = vmul.f32 %v1116, %v1105
        %v1118 = vmul.f32 %v1117, %v1116
        %v1119 = vmul.f32 0.5, %v1118
        %v1120 = vsub.f32 1.5, %v1119
        %v1121 = vmul.f32 %v1116, %v1120
        %vm1122 = vweird.f32 %v1105
        %vm1123 = vweird.f32 %v1116
        %vm1124 = vmor %vm1122, %vm1123
        %v1125 = vsel %vm1124, %v1116, %v1121
        %v1126 = vmul.f32 %v1102, %v1115
        %v1127 = vmul.f32 %v1103, %v1125
        %v1128 = vperm.slane %v618, 4
        %v1129 = vmul.f32 %v1126, %v1128
        %v1130 = vmul.f32 %v1127, %v1128
        %v1131 = vperm.slane %v618, 5
        %v1132 = vadd.f32 %v1129, %v1131
        %v1133 = vadd.f32 %v1130, %v1131
        %v1134 = vld [vmem:[%s561] sm:$0xff]
        %v1135 = vld [vmem:[%s561 + $0x8] sm:$0xff]
        %v1136 = vld [vmem:[%s561 + $0x10] sm:$0xff]
        %v1137 = vld [vmem:[%s561 + $0x18] sm:$0xff]
        %v1138 = vld [vmem:[%s561 + $0x20] sm:$0xff]
        %v1139 = vld [vmem:[%s561 + $0x28] sm:$0xff]
        %v1140 = vld [vmem:[%s561 + $0x30] sm:$0xff]
        %v1141 = vld [vmem:[%s561 + $0x38] sm:$0xff]
        %v1142 = vld [vmem:[%s561 + $0x40] sm:$0xff]
        %v1143 = vld [vmem:[%s561 + $0x48] sm:$0xff]
        %v1144 = vld [vmem:[%s561 + $0x50] sm:$0xff]
        %v1145 = vld [vmem:[%s561 + $0x58] sm:$0xff]
        %v1146 = vld [vmem:[%s561 + $0x60] sm:$0xff]
        %v1147 = vld [vmem:[%s561 + $0x68] sm:$0xff]
        %v1148 = vld [vmem:[%s561 + $0x70] sm:$0xff]
        %v1149 = vld [vmem:[%s561 + $0x78] sm:$0xff]
        %v1150 = vperm.slane %v618, 6
        %1151 = vmatpush.msra.mxu0 %v1149
        %1152 = vmatpush.msra.mxu0 %v1148
        %1153 = vmatpush.msra.mxu0 %v1147
        %1154 = vmatpush.msra.mxu0 %v1146
        %1155 = vmatpush.msra.mxu0 %v1145
        %1156 = vmatpush.msra.mxu0 %v1144
        %1157 = vmatpush.msra.mxu0 %v1143
        %1158 = vmatpush.msra.mxu0 %v1142
        %1159 = vmatpush.msra.mxu0 %v1141
        %1160 = vmatpush.msra.mxu0 %v1140
        %1161 = vmatpush.msra.mxu0 %v1139
        %1162 = vmatpush.msra.mxu0 %v1138
        %1163 = vmatpush.msra.mxu0 %v1137
        %1164 = vmatpush.msra.mxu0 %v1136
        %1165 = vmatpush.msra.mxu0 %v1135
        %1166 = vmatpush.msra.mxu0 %v1134
        %1167 = vmatmul.f32.gmra.mxu0 %v1132
        %v1168 = vpop.f32.mrf.mxu0
        %v1169 = vadd.f32 %v1150, %v1168
        %1170 = vmatmul.f32.gmra.mxu0 %v1133
        %v1171 = vpop.f32.mrf.mxu0
        %v1172 = vadd.f32 %v1150, %v1171
        %1173 = vdwg.mxu0
        %v1174 = vmul.f32 %v1169, %v1169
        %v1175 = vmul.f32 %v1172, %v1172
        %v1176 = vmul.f32 %v1169, %v1174
        %v1177 = vmul.f32 %v1172, %v1175
        %v1178 = vmul.f32 %v1176, 0.044715
        %v1179 = vmul.f32 %v1177, 0.044715
        %v1180 = vadd.f32 %v1169, %v1178
        %v1181 = vadd.f32 %v1172, %v1179
        %v1182 = vmul.f32 %v1180, 0.7978846
        %v1183 = vmul.f32 %v1181, 0.7978846
        %v1184 = vtanh.pop %v1182
        %v1185 = vtanh.pop %v1183
        %v1186 = vadd.f32 %v1184, 1.0
        %v1187 = vadd.f32 %v1185, 1.0
        %v1188 = vmul.f32 %v1186, 0.5
        %v1189 = vmul.f32 %v1187, 0.5
        %v1190 = vmul.f32 %v1169, %v1188
        %v1191 = vmul.f32 %v1172, %v1189
        %v1192 = vld [vmem:[%s470] sm:$0xff]
        %v1193 = vld [vmem:[%s470 + $0x8] sm:$0xff]
        %v1194 = vld [vmem:[%s470 + $0x10] sm:$0xff]
        %v1195 = vld [vmem:[%s470 + $0x18] sm:$0xff]
        %v1196 = vld [vmem:[%s470 + $0x20] sm:$0xff]
        %v1197 = vld [vmem:[%s470 + $0x28] sm:$0xff]
        %v1198 = vld [vmem:[%s470 + $0x30] sm:$0xff]
        %v1199 = vld [vmem:[%s470 + $0x38] sm:$0xff]
        %v1200 = vld [vmem:[%s470 + $0x40] sm:$0xff]
        %v1201 = vld [vmem:[%s470 + $0x48] sm:$0xff]
        %v1202 = vld [vmem:[%s470 + $0x50] sm:$0xff]
        %v1203 = vld [vmem:[%s470 + $0x58] sm:$0xff]
        %v1204 = vld [vmem:[%s470 + $0x60] sm:$0xff]
        %v1205 = vld [vmem:[%s470 + $0x68] sm:$0xff]
        %v1206 = vld [vmem:[%s470 + $0x70] sm:$0xff]
        %v1207 = vld [vmem:[%s470 + $0x78] sm:$0xff]
        %v1208 = vperm.slane %v618, 7
        %1209 = vmatpush.msra.mxu0 %v1207
        %1210 = vmatpush.msra.mxu0 %v1206
        %1211 = vmatpush.msra.mxu0 %v1205
        %1212 = vmatpush.msra.mxu0 %v1204
        %1213 = vmatpush.msra.mxu0 %v1203
        %1214 = vmatpush.msra.mxu0 %v1202
        %1215 = vmatpush.msra.mxu0 %v1201
        %1216 = vmatpush.msra.mxu0 %v1200
        %1217 = vmatpush.msra.mxu0 %v1199
        %1218 = vmatpush.msra.mxu0 %v1198
        %1219 = vmatpush.msra.mxu0 %v1197
        %1220 = vmatpush.msra.mxu0 %v1196
        %1221 = vmatpush.msra.mxu0 %v1195
        %1222 = vmatpush.msra.mxu0 %v1194
        %1223 = vmatpush.msra.mxu0 %v1193
        %1224 = vmatpush.msra.mxu0 %v1192
        %1225 = vmatmul.f32.gmra.mxu0 %v1190
        %v1226 = vpop.f32.mrf.mxu0
        %v1227 = vadd.f32 %v1208, %v1226
        %1228 = vmatmul.f32.gmra.mxu0 %v1191
        %v1229 = vpop.f32.mrf.mxu0
        %v1230 = vadd.f32 %v1208, %v1229
        %1231 = vdwg.mxu0
        %v1232 = vadd.f32 %v1082, %v1227
        %v1233 = vadd.f32 %v1083, %v1230
        %1234 = vst [vmem:[#allocation2] sm:$0xff] %v1232
        %1235 = vst [vmem:[#allocation2 + $0x8] sm:$0xff] %v1233
        %p1236 = scmp.eq.s32.totalorder %s36, 1
        // Predicated region
        $region85: #{tpu_custom_call.1} parent=59 // pred_check
          %p1237 = pneg %p1236
        $region86: #{tpu_custom_call.1} parent=59 // pred_check_branch
          %1239 = sbr.rel (%p1237) target = $region88
        $region87: #{tpu_custom_call.1} parent=59 // pred_region
          %v1240 = vlaneseq
          %v1241 = vshrl.u32 %v1240, 7
          %v1242 = vadd.s32 %v1241, 8
          %vm1243 = vcmp.lt.s32.totalorder %v1241, 16
          %vm1244 = vcmp.lt.s32.totalorder %v1242, 16
          %v1245 = vsel %vm1243, 1, 0
          %v1246 = vsel %vm1244, 1, 0
          %v1247 = vcvt.s32.f32 %v1245
          %v1248 = vcvt.s32.f32 %v1246
          %v1249 = vld [vmem:[#allocation2] sm:$0xff]
          %v1250 = vld [vmem:[#allocation2 + $0x8] sm:$0xff]
          %v1251 = vmul.f32 %v1249, %v1247
          %v1252 = vmul.f32 %v1250, %v1248
          %v1253 = vadd.f32 %v1251, %v1252
          %v1254 = vrot.slane %v1253, 4
          %v1255 = vadd.f32 %v1253, %v1254
          %v1256 = vrot.slane %v1255, 2
          %v1257 = vadd.f32 %v1255, %v1256
          %v1258 = vrot.slane %v1257, 1
          %v1259 = vadd.f32 %v1257, %v1258
          %v1260 = vmul.f32 %v1259, 0.0625
          %v1261 = vld [vmem:[#allocation11] sm:$0xff]
          %v1262 = vld [vmem:[#allocation11 + $0x8] sm:$0xff]
          %v1263 = vld [vmem:[#allocation11 + $0x10] sm:$0xff]
          %v1264 = vld [vmem:[#allocation11 + $0x18] sm:$0xff]
          %v1265 = vld [vmem:[#allocation11 + $0x20] sm:$0xff]
          %v1266 = vld [vmem:[#allocation11 + $0x28] sm:$0xff]
          %v1267 = vld [vmem:[#allocation11 + $0x30] sm:$0xff]
          %v1268 = vld [vmem:[#allocation11 + $0x38] sm:$0xff]
          %v1269 = vld [vmem:[#allocation11 + $0x40] sm:$0xff]
          %v1270 = vld [vmem:[#allocation11 + $0x48] sm:$0xff]
          %v1271 = vld [vmem:[#allocation11 + $0x50] sm:$0xff]
          %v1272 = vld [vmem:[#allocation11 + $0x58] sm:$0xff]
          %v1273 = vld [vmem:[#allocation11 + $0x60] sm:$0xff]
          %v1274 = vld [vmem:[#allocation11 + $0x68] sm:$0xff]
          %v1275 = vld [vmem:[#allocation11 + $0x70] sm:$0xff]
          %v1276 = vld [vmem:[#allocation11 + $0x78] sm:$0xff]
          %v1277 = vld [vmem:[%s9] sm:$0x1]
          %1278 = vmatpush.msra.mxu0 %v1276
          %1279 = vmatpush.msra.mxu0 %v1275
          %1280 = vmatpush.msra.mxu0 %v1274
          %1281 = vmatpush.msra.mxu0 %v1273
          %1282 = vmatpush.msra.mxu0 %v1272
          %1283 = vmatpush.msra.mxu0 %v1271
          %1284 = vmatpush.msra.mxu0 %v1270
          %1285 = vmatpush.msra.mxu0 %v1269
          %1286 = vmatpush.msra.mxu0 %v1268
          %1287 = vmatpush.msra.mxu0 %v1267
          %1288 = vmatpush.msra.mxu0 %v1266
          %1289 = vmatpush.msra.mxu0 %v1265
          %1290 = vmatpush.msra.mxu0 %v1264
          %1291 = vmatpush.msra.mxu0 %v1263
          %1292 = vmatpush.msra.mxu0 %v1262
          %1293 = vmatpush.msra.mxu0 %v1261
          %1294 = vmatmul.f32.gmra.mxu0 %v1260
          %v1295 = vpop.f32.mrf.mxu0
          %v1296 = vadd.f32 %v1277, %v1295
          %1297 = vdwg.mxu0
          %1298 = vst [vmem:[%s546] sm:$0x1] %v1296
        $region88: #{tpu_custom_call.1} parent=59 // pred_fallthru
          _
        %s1299 = sand.u32 %s291, 1
        %s1300 = scalar_lea.sflag [#allocation5], %s1299
        %s1301 = sand.u32 %s291, 1
        %s1302 = scalar_lea.vmem [#allocation12], %s1301
        // Predicated region
        $region89: #{tpu_custom_call.1} parent=59 // pred_check
          %p1303 = pneg %p301
        $region90: #{tpu_custom_call.1} parent=59 // pred_check_branch
          %1305 = sbr.rel (%p1303) target = $region92
        $region91: #{tpu_custom_call.1} parent=59 // pred_region
          %1307 = vsyncadd %s1300, 0
          %s1308 = scalar_lea.hbm %s10, %s35
          %s1310 = sshll.u32 %s1302, 4
          %s1311 = int_to_ptr.vmem [resolvable:$true] %s1310
          %s1312 = sshll.u32 %s1308, 4
          %s1313 = int_to_ptr.hbm [resolvable:$true] %s1312
          %1315 = dma.vmem_to_hbm [thread:$0]  %s1311, 16, %s1313, %s1300
        $region92: #{tpu_custom_call.1} parent=59 // pred_fallthru
          _
      $region60: #{tpu_custom_call.1} parent=5 // pred_fallthru
        _
      %p1316 = scmp.le.s32.totalorder 2, %s26
      // Predicated region
      $region93: #{tpu_custom_call.1} parent=5 // pred_check
        %p1317 = pneg %p1316
      $region94: #{tpu_custom_call.1} parent=5 // pred_check_branch
        %1319 = sbr.rel (%p1317) target = $region96
      $region95: #{tpu_custom_call.1} parent=5 // pred_region
        %s1320 = ssub.s32 %s26, 2
        // Predicated region
        $region97: #{tpu_custom_call.1} parent=95 // pred_check
          %p1321 = pneg %p307
        $region98: #{tpu_custom_call.1} parent=95 // pred_check_branch
          %1323 = sbr.rel (%p1321) target = $region100
        $region99: #{tpu_custom_call.1} parent=95 // pred_region
          %s1324 = sand.u32 %s292, 1
          %s1325 = scalar_lea.sflag [#allocation5], %s1324
          %s1326 = sand.u32 %s292, 1
          %s1327 = scalar_lea.vmem [#allocation12], %s1326
          %1329 = dma.done %s1325, 16
        $region100: #{tpu_custom_call.1} parent=95 // pred_fallthru
          _
      $region96: #{tpu_custom_call.1} parent=5 // pred_fallthru
        _
    $region6: #{tpu_custom_call.1} parent=1 // loop_footer
      %s30 = sadd.s32 1, %s26
    $region7: #{tpu_custom_call.1} parent=1 // loop_footer_branch
      %25 = sbr.rel target = $region3
    $region8: #{tpu_custom_call.1} parent=1 // loop_exit
      _
    %1330 = vsyncpa [#allocation4], 1
    %s1331 = scalar_lea.sflag [#allocation4], 1
    %1332 = vsyncpa %s1331, 1
    %1333 = vsyncpa [#allocation7], 1
    %s1334 = scalar_lea.sflag [#allocation7], 1
    %1335 = vsyncpa %s1334, 1
    %1336 = vsyncpa [#allocation10], 1
    %s1337 = scalar_lea.sflag [#allocation10], 1
    %1338 = vsyncpa %s1337, 1
    %1339 = vsyncpa [#allocation5], 1
    %s1340 = scalar_lea.sflag [#allocation5], 1
    %1341 = vsyncpa %s1340, 1

</llo_original>
